<compile_context>
chip_gen: v7x
topology: tpu7x:2x2x1
jax: 0.10.0
libtpu: 0.0.40
codegen_flags: <defaults>
</compile_context>

<pallas_src>
import functools

import jax
import jax.numpy as jnp
from jax.experimental import pallas as pl
from jax.experimental.pallas import tpu as pltpu

LANE = 128                       # per-gate lane block (hidden padded to this)

_VMEM = pl.BlockSpec(memory_space=pltpu.MemorySpace.VMEM)
_SMEM = pl.BlockSpec(memory_space=pltpu.MemorySpace.SMEM)


# -----------------------------------------------------------------------------
# Pallas kernels
# -----------------------------------------------------------------------------
def encoder_kernel(xcat_ref, wx_ref, wh_ref, b_ref, h_out_ref, c_out_ref,
                   gx_ref):
    """Fused bidirectional single-layer LSTM.

    State layout (lanes): [h_fwd(0:H) | h_bwd(H:2H) | zero pad (2H:P)].
    Gates: 4 blocks of P=128 lanes (i, f, g, o); inside each block the fwd and
    bwd sub-blocks sit side by side, so ONE recurrent matmul + one set of gate
    ops per step advances both directions (fwd consumes x_t, bwd x_{T-1-t}).
    The final (h, c) are already in the torch.cat((h[-2], h[-1]), 1) layout the
    decoder expects (padded lanes stay exactly zero).
    """
    TB = xcat_ref.shape[0]
    Bp, P = h_out_ref.shape
    T = TB // Bp

    # Hoisted input projection for BOTH directions (+ folded bias):
    # one big matmul completely off the recurrent critical path.
    gx_ref[...] = (jnp.dot(xcat_ref[...], wx_ref[...],
                           preferred_element_type=jnp.float32) + b_ref[...])

    wh = wh_ref[...]

    def step(t, carry):
        h, c = carry
        row = pl.multiple_of(t * Bp, 8)
        gates = gx_ref[pl.ds(row, Bp), :] + jnp.dot(
            h, wh, preferred_element_type=jnp.float32)
        i = jax.nn.sigmoid(gates[:, 0 * P:1 * P])
        f = jax.nn.sigmoid(gates[:, 1 * P:2 * P])
        g = jnp.tanh(gates[:, 2 * P:3 * P])
        o = jax.nn.sigmoid(gates[:, 3 * P:4 * P])
        c_new = f * c + i * g
        h_new = o * jnp.tanh(c_new)
        return h_new, c_new

    zeros = jnp.zeros((Bp, P), jnp.float32)
    h_fin, c_fin = jax.lax.fori_loop(0, T, step, (zeros, zeros))
    h_out_ref[...] = h_fin
    c_out_ref[...] = c_fin


def decoder_kernel(v_real, trg_ref, tf_ref, h0_ref, c0_ref, emb_ref,
                   wcat_ref, b_ref, wfc_ref, bfc_ref, out_ref):
    """Entire decoder loop fused into one kernel.

    Per step: one-hot embedding gather (MXU), fused [x, h] @ W_cat gate matmul,
    LSTM cell, FC logits (lane-dense 128-wide store), masked argmax and
    teacher-forcing select -- weights stay VMEM-resident across all steps.
    """
    S, Bp, VP = out_ref.shape
    P = h0_ref.shape[1]

    emb = emb_ref[...]
    wcat = wcat_ref[...]
    b = b_ref[...]
    wfc = wfc_ref[...]
    bfc = bfc_ref[...]
    trg_all = trg_ref[...]                                     # (Bp, S) int32

    vcol = jax.lax.broadcasted_iota(jnp.int32, (Bp, VP), 1)
    tcol = jax.lax.broadcasted_iota(jnp.int32, (Bp, S), 1)

    out_ref[...] = jnp.zeros_like(out_ref)   # torch.zeros(); row t=0 stays 0

    def trg_at(t):                           # (Bp, 1) int32 ids of trg[:, t]
        return jnp.sum(jnp.where(tcol == t, trg_all, 0), axis=1, keepdims=True)

    def step(t, carry):
        ids, h, c = carry
        onehot = (vcol == ids).astype(jnp.float32)             # (Bp, VP)
        x = jnp.dot(onehot, emb, preferred_element_type=jnp.float32)  # (Bp, E)
        xh = jnp.concatenate([x, h], axis=1)                   # (Bp, E+P)
        gates = jnp.dot(xh, wcat, preferred_element_type=jnp.float32) + b
        i = jax.nn.sigmoid(gates[:, 0 * P:1 * P])
        f = jax.nn.sigmoid(gates[:, 1 * P:2 * P])
        g = jnp.tanh(gates[:, 2 * P:3 * P])
        o = jax.nn.sigmoid(gates[:, 3 * P:4 * P])
        c_new = f * c + i * g
        h_new = o * jnp.tanh(c_new)
        logits = jnp.dot(h_new, wfc, preferred_element_type=jnp.float32) + bfc
        out_ref[t] = logits                                    # lane-dense store

        # argmax over the real vocab (first max index, like torch.argmax)
        masked = jnp.where(vcol < v_real, logits, -1e30)
        mx = jnp.max(masked, axis=1, keepdims=True)
        top1 = jnp.min(jnp.where(masked == mx, vcol, VP),
                       axis=1, keepdims=True)

        tf = tf_ref[t]                                         # SMEM scalar
        ids_next = jnp.where(tf > 0, trg_at(t), top1)
        return ids_next, h_new, c_new

    jax.lax.fori_loop(1, S, step, (trg_at(0), h0_ref[...], c0_ref[...]))


# -----------------------------------------------------------------------------
# pallas_call wrappers
# -----------------------------------------------------------------------------
def encoder_forward(xcat, wx, wh, b, Bp, P):
    TB, twoE = xcat.shape
    T = TB // Bp
    G = 4 * P
    flops = 2 * TB * twoE * G + T * 2 * Bp * P * G
    bytes_acc = 4 * (xcat.size + wx.size + wh.size + b.size + 2 * Bp * P)
    return pl.pallas_call(
        encoder_kernel,
        out_shape=(jax.ShapeDtypeStruct((Bp, P), jnp.float32),
                   jax.ShapeDtypeStruct((Bp, P), jnp.float32)),
        in_specs=[_VMEM] * 4,
        out_specs=(_VMEM, _VMEM),
        scratch_shapes=[pltpu.VMEM((TB, G), jnp.float32)],
        compiler_params=pltpu.CompilerParams(vmem_limit_bytes=32 * 1024 * 1024),
        cost_estimate=pl.CostEstimate(flops=int(flops),
                                      transcendentals=int(T * Bp * 6 * P),
                                      bytes_accessed=int(bytes_acc)),
    )(xcat, wx, wh, b)


def decoder_forward(trg_p, tf_i, h0, c0, demb, wcat, bd, wfc, bfc, v_real):
    Bp, S = trg_p.shape
    P = h0.shape[1]
    VP, E = demb.shape
    steps = max(S - 1, 1)
    flops = steps * (2 * Bp * VP * E + 2 * Bp * (E + P) * 4 * P
                     + 2 * Bp * P * VP)
    bytes_acc = 4 * (trg_p.size + tf_i.size + h0.size + c0.size + demb.size
                     + wcat.size + bd.size + wfc.size + bfc.size + S * Bp * VP)
    return pl.pallas_call(
        functools.partial(decoder_kernel, v_real),
        out_shape=jax.ShapeDtypeStruct((S, Bp, VP), jnp.float32),
        in_specs=[_VMEM, _SMEM] + [_VMEM] * 7,
        out_specs=_VMEM,
        compiler_params=pltpu.CompilerParams(vmem_limit_bytes=32 * 1024 * 1024),
        cost_estimate=pl.CostEstimate(flops=int(flops),
                                      transcendentals=int(steps * Bp * 6 * P),
                                      bytes_accessed=int(bytes_acc)),
    )(trg_p, tf_i, h0, c0, demb, wcat, bd, wfc, bfc)


# -----------------------------------------------------------------------------
# Seq2Seq forward (glue in plain JAX, hot path in the two fused kernels)
# -----------------------------------------------------------------------------
@functools.partial(jax.jit, static_argnames=("v_real",))
def seq2seq_forward(params, src, trg, tf_flags, *, v_real):
    # TODO(synk): nn.Dropout(0.2) on embeddings omitted (eval-mode identity).
    B, T_src = src.shape
    E = params["enc_embed"].shape[1]
    P = params["enc_wh"].shape[0]

    # Pad batch to a multiple of 8 sublanes (occupancy + aligned slicing).
    Bp = ((B + 7) // 8) * 8
    src_p = jnp.pad(src, ((0, Bp - B), (0, 0)))
    trg_p = jnp.pad(trg, ((0, Bp - B), (0, 0)))

    # ---- encoder: embedding lookup + fwd/bwd pairing stays in cheap XLA ----
    emb = jnp.take(params["enc_embed"], src_p, axis=0)         # (Bp, T, E)
    emb_t = jnp.transpose(emb, (1, 0, 2))                      # (T, Bp, E)
    xcat = jnp.concatenate([emb_t, jnp.flip(emb_t, axis=0)], axis=-1)
    xcat = xcat.reshape(T_src * Bp, 2 * E)                     # (T*Bp, 2E)

    h0, c0 = encoder_forward(xcat, params["enc_wx"], params["enc_wh"],
                             params["enc_b"], Bp, P)

    # ---- decoder: the whole t-loop runs inside one kernel -------------------
    out_tbv = decoder_forward(trg_p, tf_flags.astype(jnp.int32), h0, c0,
                              params["dec_embed"], params["dec_wcat"],
                              params["dec_b"], params["dec_fc_w"],
                              params["dec_fc_b"], v_real)

    return jnp.transpose(out_tbv, (1, 0, 2))[:B, :, :v_real]   # (B, S_trg, V)


# -----------------------------------------------------------------------------
# Parameter construction (PyTorch-like raw params) + kernel-layout packing
# -----------------------------------------------------------------------------
def make_params(key, enc_vocab, dec_vocab, embed_dim, en_hidden):
    H = en_hidden
    DH = 2 * H                                  # decoder LSTM hidden dim
    ks = jax.random.split(key, 16)
    n = lambda k, shp: jax.random.normal(k, shp, jnp.float32) * 0.1
    return {
        # embeddings (stand-ins for the GloVe matrices)
        "enc_embed": n(ks[0], (enc_vocab, embed_dim)),
        "dec_embed": n(ks[1], (dec_vocab, embed_dim)),
        # encoder bi-LSTM (1 layer): weights transposed to (in, 4H)
        "enc_wih_f": n(ks[2], (embed_dim, 4 * H)),
        "enc_whh_f": n(ks[3], (H, 4 * H)),
        "enc_b_f":   n(ks[4], (1, 4 * H)),      # bias_ih + bias_hh combined
        "enc_wih_b": n(ks[5], (embed_dim, 4 * H)),
        "enc_whh_b": n(ks[6], (H, 4 * H)),
        "enc_b_b":   n(ks[7], (1, 4 * H)),
        # decoder LSTM (1 layer, hidden = 2H)
        "dec_wih":   n(ks[8], (embed_dim, 4 * DH)),
        "dec_whh":   n(ks[9], (DH, 4 * DH)),
        "dec_b":     n(ks[10], (1, 4 * DH)),
        # decoder FC: 2H -> vocab
        "dec_fc_w":  n(ks[11], (DH, dec_vocab)),
        "dec_fc_b":  n(ks[12], (1, dec_vocab)),
    }


def pack_params(p, lane_block=LANE):
    """Re-pack PyTorch-layout weights into the fused, lane-padded layouts."""
    E = p["enc_embed"].shape[1]
    H = p["enc_whh_f"].shape[0]
    DH = 2 * H
    P = lane_block
    assert 2 * H <= P and DH <= P, "hidden must fit a single 128-lane gate block"
    V = p["dec_fc_w"].shape[1]
    VP = ((V + P - 1) // P) * P

    def place(dst, src, r0, c0):
        return dst.at[r0:r0 + src.shape[0], c0:c0 + src.shape[1]].set(src)

    # --- encoder: both directions fused, per-gate 128-lane blocks -----------
    wx = jnp.zeros((2 * E, 4 * P), jnp.float32)  # rows: [emb(x_t) | emb(x_rev)]
    wh = jnp.zeros((P, 4 * P), jnp.float32)      # block-diag fwd/bwd recurrence
    be = jnp.zeros((1, 4 * P), jnp.float32)
    for g in range(4):                           # PyTorch gate order i, f, g, o
        wx = place(wx, p["enc_wih_f"][:, g * H:(g + 1) * H], 0, g * P)
        wx = place(wx, p["enc_wih_b"][:, g * H:(g + 1) * H], E, g * P + H)
        wh = place(wh, p["enc_whh_f"][:, g * H:(g + 1) * H], 0, g * P)
        wh = place(wh, p["enc_whh_b"][:, g * H:(g + 1) * H], H, g * P + H)
        be = place(be, p["enc_b_f"][:, g * H:(g + 1) * H], 0, g * P)
        be = place(be, p["enc_b_b"][:, g * H:(g + 1) * H], 0, g * P + H)

    # --- decoder: fused [x, h] weight, per-gate 128-lane blocks --------------
    wcat = jnp.zeros((E + P, 4 * P), jnp.float32)
    bd = jnp.zeros((1, 4 * P), jnp.float32)
    for g in range(4):
        wcat = place(wcat, p["dec_wih"][:, g * DH:(g + 1) * DH], 0, g * P)
        wcat = place(wcat, p["dec_whh"][:, g * DH:(g + 1) * DH], E, g * P)
        bd = place(bd, p["dec_b"][:, g * DH:(g + 1) * DH], 0, g * P)

    wfc = place(jnp.zeros((P, VP), jnp.float32), p["dec_fc_w"], 0, 0)
    bfc = place(jnp.zeros((1, VP), jnp.float32), p["dec_fc_b"], 0, 0)
    demb = place(jnp.zeros((VP, E), jnp.float32), p["dec_embed"], 0, 0)

    return {
        "enc_embed": p["enc_embed"],
        "enc_wx": wx, "enc_wh": wh, "enc_b": be,
        "dec_wcat": wcat, "dec_b": bd,
        "dec_fc_w": wfc, "dec_fc_b": bfc, "dec_embed": demb,
    }


# -----------------------------------------------------------------------------
# Demo
# -----------------------------------------------------------------------------
if __name__ == "__main__":
    B, S_SRC, S_TRG = 2, 10, 8
    EMBED_DIM = 32
    EN_HIDDEN = 32            # decoder hidden becomes 2*32 = 64 (padded to 128)
    ENC_VOCAB, DEC_VOCAB = 48, 40
    TEACHER_FORCING_RATIO = 0.6

    root = jax.random.PRNGKey(0)
    kp, ks, kt, kf = jax.random.split(root, 4)

    raw = make_params(kp, ENC_VOCAB, DEC_VOCAB, EMBED_DIM, EN_HIDDEN)
    params = pack_params(raw)

    src = jax.random.randint(ks, (B, S_SRC), 0, ENC_VOCAB, dtype=jnp.int32)
    trg = jax.random.randint(kt, (B, S_TRG), 0, DEC_VOCAB, dtype=jnp.int32)
    # deterministic per-step teacher-forcing decisions (torch: random.random())
    tf_flags = jax.random.uniform(kf, (S_TRG,)) < TEACHER_FORCING_RATIO

    outputs = seq2seq_forward(params, src, trg, tf_flags, v_real=DEC_VOCAB)
    outputs = jax.block_until_ready(outputs)

    assert outputs.shape == (B, S_TRG, DEC_VOCAB)
    assert outputs.dtype == jnp.float32
    assert bool(jnp.all(outputs[:, 0, :] == 0.0))     # t=0 row left as zeros
    assert bool(jnp.all(jnp.isfinite(outputs)))
    print("KERNEL_OK")
</pallas_src>

<mosaic_0001>
module attributes {stable_mosaic.version = 11 : i64} {
  func.func @encoder_kernel(%arg0: memref<80x64xf32, #tpu.memory_space<vmem>>, %arg1: memref<64x512xf32, #tpu.memory_space<vmem>>, %arg2: memref<128x512xf32, #tpu.memory_space<vmem>>, %arg3: memref<1x512xf32, #tpu.memory_space<vmem>>, %arg4: memref<8x128xf32, #tpu.memory_space<vmem>>, %arg5: memref<8x128xf32, #tpu.memory_space<vmem>>, %arg6: memref<80x512xf32, #tpu.memory_space<vmem>>) attributes {dimension_semantics = [], scalar_prefetch = 0 : i64, scratch_operands = 1 : i64, tpu.core_type = #tpu.core_type<tc>} {
    %c0 = arith.constant 0 : index
    %c0_0 = arith.constant 0 : index
    %0 = vector.load %arg0[%c0, %c0_0] : memref<80x64xf32, #tpu.memory_space<vmem>>, vector<80x64xf32>
    %c0_1 = arith.constant 0 : index
    %c0_2 = arith.constant 0 : index
    %1 = vector.load %arg1[%c0_1, %c0_2] : memref<64x512xf32, #tpu.memory_space<vmem>>, vector<64x512xf32>
    %cst = arith.constant dense<0.000000e+00> : vector<80x512xf32>
    %2 = tpu.matmul %0, %1, %cst {dimension_numbers = #tpu.dot_dimension_numbers<[1], [0], [0], [1], [0, 0, 1, 1], [], []>} : vector<80x64xf32>, vector<64x512xf32>, vector<80x512xf32> -> vector<80x512xf32>
    %c0_3 = arith.constant 0 : index
    %c0_4 = arith.constant 0 : index
    %3 = vector.load %arg3[%c0_3, %c0_4] : memref<1x512xf32, #tpu.memory_space<vmem>>, vector<1x512xf32>
    %4 = vector.broadcast %3 : vector<1x512xf32> to vector<80x512xf32>
    %5 = arith.addf %2, %4 : vector<80x512xf32>
    %c0_5 = arith.constant 0 : index
    %c0_6 = arith.constant 0 : index
    %6 = vector.load %arg6[%c0_5, %c0_6] : memref<80x512xf32, #tpu.memory_space<vmem>>, vector<80x512xf32>
    tpu.vector_store %arg6[%c0_5, %c0_6], %5 {strides = array<i32>} : memref<80x512xf32, #tpu.memory_space<vmem>>, vector<80x512xf32>,
    %c0_7 = arith.constant 0 : index
    %c0_8 = arith.constant 0 : index
    %7 = vector.load %arg2[%c0_7, %c0_8] : memref<128x512xf32, #tpu.memory_space<vmem>>, vector<128x512xf32>
    %cst_9 = arith.constant 0.000000e+00 : f32
    %8 = vector.broadcast %cst_9 : f32 to vector<8x128xf32>
    %c0_i32 = arith.constant 0 : i32
    %c10_i32 = arith.constant 10 : i32
    %9 = arith.addi %c0_i32, %c10_i32 : i32
    %c1_i32 = arith.constant 1 : i32
    %10:2 = scf.for %arg7 = %c0_i32 to %9 step %c1_i32 iter_args(%arg8 = %8, %arg9 = %8) -> (vector<8x128xf32>, vector<8x128xf32>)  : i32 {
      %c8_i32 = arith.constant 8 : i32
      %13 = arith.muli %arg7, %c8_i32 : i32
      %14 = tpu.assume_multiple %13, 8 : i32
      %15 = arith.index_cast %14 : i32 to index
      %c0_15 = arith.constant 0 : index
      %16 = vector.load %arg6[%15, %c0_15] : memref<80x512xf32, #tpu.memory_space<vmem>>, vector<8x512xf32>
      %cst_16 = arith.constant dense<0.000000e+00> : vector<8x512xf32>
      %17 = tpu.matmul %arg8, %7, %cst_16 {dimension_numbers = #tpu.dot_dimension_numbers<[1], [0], [0], [1], [0, 0, 1, 1], [], []>} : vector<8x128xf32>, vector<128x512xf32>, vector<8x512xf32> -> vector<8x512xf32>
      %18 = arith.addf %16, %17 : vector<8x512xf32>
      %19 = vector.extract_strided_slice %18 {offsets = [0, 0], sizes = [8, 128], strides = [1, 1]} : vector<8x512xf32> to vector<8x128xf32>
      %20 = arith.negf %19 : vector<8x128xf32>
      %21 = math.exp %20 : vector<8x128xf32>
      %cst_17 = arith.constant 1.000000e+00 : f32
      %22 = vector.broadcast %cst_17 : f32 to vector<8x128xf32>
      %23 = arith.addf %22, %21 : vector<8x128xf32>
      %24 = arith.divf %22, %23 : vector<8x128xf32>
      %25 = vector.extract_strided_slice %18 {offsets = [0, 128], sizes = [8, 128], strides = [1, 1]} : vector<8x512xf32> to vector<8x128xf32>
      %26 = arith.negf %25 : vector<8x128xf32>
      %27 = math.exp %26 : vector<8x128xf32>
      %cst_18 = arith.constant 1.000000e+00 : f32
      %28 = vector.broadcast %cst_18 : f32 to vector<8x128xf32>
      %29 = arith.addf %28, %27 : vector<8x128xf32>
      %30 = arith.divf %28, %29 : vector<8x128xf32>
      %31 = vector.extract_strided_slice %18 {offsets = [0, 256], sizes = [8, 128], strides = [1, 1]} : vector<8x512xf32> to vector<8x128xf32>
      %32 = math.tanh %31 : vector<8x128xf32>
      %33 = vector.extract_strided_slice %18 {offsets = [0, 384], sizes = [8, 128], strides = [1, 1]} : vector<8x512xf32> to vector<8x128xf32>
      %34 = arith.negf %33 : vector<8x128xf32>
      %35 = math.exp %34 : vector<8x128xf32>
      %cst_19 = arith.constant 1.000000e+00 : f32
      %36 = vector.broadcast %cst_19 : f32 to vector<8x128xf32>
      %37 = arith.addf %36, %35 : vector<8x128xf32>
      %38 = arith.divf %36, %37 : vector<8x128xf32>
      %39 = arith.mulf %30, %arg9 : vector<8x128xf32>
      %40 = arith.mulf %24, %32 : vector<8x128xf32>
      %41 = arith.addf %39, %40 : vector<8x128xf32>
      %42 = math.tanh %41 : vector<8x128xf32>
      %43 = arith.mulf %38, %42 : vector<8x128xf32>
      scf.yield %43, %41 : vector<8x128xf32>, vector<8x128xf32>
    }
    %c10_i32_10 = arith.constant 10 : i32
    %c0_11 = arith.constant 0 : index
    %c0_12 = arith.constant 0 : index
    %11 = vector.load %arg4[%c0_11, %c0_12] : memref<8x128xf32, #tpu.memory_space<vmem>>, vector<8x128xf32>
    tpu.vector_store %arg4[%c0_11, %c0_12], %10#0 {strides = array<i32>} : memref<8x128xf32, #tpu.memory_space<vmem>>, vector<8x128xf32>,
    %c0_13 = arith.constant 0 : index
    %c0_14 = arith.constant 0 : index
    %12 = vector.load %arg5[%c0_13, %c0_14] : memref<8x128xf32, #tpu.memory_space<vmem>>, vector<8x128xf32>
    tpu.vector_store %arg5[%c0_13, %c0_14], %10#1 {strides = array<i32>} : memref<8x128xf32, #tpu.memory_space<vmem>>, vector<8x128xf32>,
    return
  }
}

module attributes {stable_mosaic.version = 11 : i64} {
  func.func @decoder_kernel(%arg0: memref<8x8xi32, #tpu.memory_space<vmem>>, %arg1: memref<8xi32, #tpu.memory_space<smem>>, %arg2: memref<8x128xf32, #tpu.memory_space<vmem>>, %arg3: memref<8x128xf32, #tpu.memory_space<vmem>>, %arg4: memref<128x32xf32, #tpu.memory_space<vmem>>, %arg5: memref<160x512xf32, #tpu.memory_space<vmem>>, %arg6: memref<1x512xf32, #tpu.memory_space<vmem>>, %arg7: memref<128x128xf32, #tpu.memory_space<vmem>>, %arg8: memref<1x128xf32, #tpu.memory_space<vmem>>, %arg9: memref<8x8x128xf32, #tpu.memory_space<vmem>>) attributes {dimension_semantics = [], scalar_prefetch = 0 : i64, scratch_operands = 0 : i64, tpu.core_type = #tpu.core_type<tc>} {
    %c0 = arith.constant 0 : index
    %c0_0 = arith.constant 0 : index
    %0 = vector.load %arg4[%c0, %c0_0] : memref<128x32xf32, #tpu.memory_space<vmem>>, vector<128x32xf32>
    %c0_1 = arith.constant 0 : index
    %c0_2 = arith.constant 0 : index
    %1 = vector.load %arg5[%c0_1, %c0_2] : memref<160x512xf32, #tpu.memory_space<vmem>>, vector<160x512xf32>
    %c0_3 = arith.constant 0 : index
    %c0_4 = arith.constant 0 : index
    %2 = vector.load %arg6[%c0_3, %c0_4] : memref<1x512xf32, #tpu.memory_space<vmem>>, vector<1x512xf32>
    %c0_5 = arith.constant 0 : index
    %c0_6 = arith.constant 0 : index
    %3 = vector.load %arg7[%c0_5, %c0_6] : memref<128x128xf32, #tpu.memory_space<vmem>>, vector<128x128xf32>
    %c0_7 = arith.constant 0 : index
    %c0_8 = arith.constant 0 : index
    %4 = vector.load %arg8[%c0_7, %c0_8] : memref<1x128xf32, #tpu.memory_space<vmem>>, vector<1x128xf32>
    %c0_9 = arith.constant 0 : index
    %c0_10 = arith.constant 0 : index
    %5 = vector.load %arg0[%c0_9, %c0_10] : memref<8x8xi32, #tpu.memory_space<vmem>>, vector<8x8xi32>
    %6 = tpu.iota {dimensions = array<i32: 1>} : vector<8x128xi32>
    %7 = tpu.iota {dimensions = array<i32: 1>} : vector<8x8xi32>
    %cst = arith.constant 0.000000e+00 : f32
    %8 = vector.broadcast %cst : f32 to vector<8x8x128xf32>
    %c0_11 = arith.constant 0 : index
    %c0_12 = arith.constant 0 : index
    %c0_13 = arith.constant 0 : index
    %9 = vector.load %arg9[%c0_11, %c0_12, %c0_13] : memref<8x8x128xf32, #tpu.memory_space<vmem>>, vector<8x8x128xf32>
    tpu.vector_store %arg9[%c0_11, %c0_12, %c0_13], %8 {strides = array<i32>} : memref<8x8x128xf32, #tpu.memory_space<vmem>>, vector<8x8x128xf32>,
    %c0_i32 = arith.constant 0 : i32
    %10 = vector.broadcast %c0_i32 : i32 to vector<8x8xi32>
    %11 = arith.cmpi eq, %7, %10 : vector<8x8xi32>
    %c0_i32_14 = arith.constant 0 : i32
    %12 = vector.broadcast %c0_i32_14 : i32 to vector<8x8xi32>
    %13 = arith.select %11, %5, %12 : vector<8x8xi1>, vector<8x8xi32>
    %cst_15 = arith.constant dense<0> : vector<8xi32>
    %14 = vector.multi_reduction <add>, %13, %cst_15 [1] : vector<8x8xi32> to vector<8xi32>
    %15 = vector.shape_cast %14 : vector<8xi32> to vector<8x1xi32>
    %c0_16 = arith.constant 0 : index
    %c0_17 = arith.constant 0 : index
    %16 = vector.load %arg2[%c0_16, %c0_17] : memref<8x128xf32, #tpu.memory_space<vmem>>, vector<8x128xf32>
    %c0_18 = arith.constant 0 : index
    %c0_19 = arith.constant 0 : index
    %17 = vector.load %arg3[%c0_18, %c0_19] : memref<8x128xf32, #tpu.memory_space<vmem>>, vector<8x128xf32>
    %c1_i32 = arith.constant 1 : i32
    %c7_i32 = arith.constant 7 : i32
    %18 = arith.addi %c1_i32, %c7_i32 : i32
    %c1_i32_20 = arith.constant 1 : i32
    %19:3 = scf.for %arg10 = %c1_i32 to %18 step %c1_i32_20 iter_args(%arg11 = %15, %arg12 = %16, %arg13 = %17) -> (vector<8x1xi32>, vector<8x128xf32>, vector<8x128xf32>)  : i32 {
      %20 = vector.broadcast %arg11 : vector<8x1xi32> to vector<8x128xi32>
      %21 = arith.cmpi eq, %6, %20 : vector<8x128xi32>
      %22 = arith.extui %21 : vector<8x128xi1> to vector<8x128xi32>
      %23 = arith.sitofp %22 : vector<8x128xi32> to vector<8x128xf32>
      %cst_22 = arith.constant dense<0.000000e+00> : vector<8x32xf32>
      %24 = tpu.matmul %23, %0, %cst_22 {dimension_numbers = #tpu.dot_dimension_numbers<[1], [0], [0], [1], [0, 0, 1, 1], [], []>} : vector<8x128xf32>, vector<128x32xf32>, vector<8x32xf32> -> vector<8x32xf32>
      %25 = tpu.concatenate %24, %arg12 in 1 : vector<8x32xf32>, vector<8x128xf32> -> vector<8x160xf32>
      %cst_23 = arith.constant dense<0.000000e+00> : vector<8x512xf32>
      %26 = tpu.matmul %25, %1, %cst_23 {dimension_numbers = #tpu.dot_dimension_numbers<[1], [0], [0], [1], [0, 0, 1, 1], [], []>} : vector<8x160xf32>, vector<160x512xf32>, vector<8x512xf32> -> vector<8x512xf32>
      %27 = vector.broadcast %2 : vector<1x512xf32> to vector<8x512xf32>
      %28 = arith.addf %26, %27 : vector<8x512xf32>
      %29 = vector.extract_strided_slice %28 {offsets = [0, 0], sizes = [8, 128], strides = [1, 1]} : vector<8x512xf32> to vector<8x128xf32>
      %30 = arith.negf %29 : vector<8x128xf32>
      %31 = math.exp %30 : vector<8x128xf32>
      %cst_24 = arith.constant 1.000000e+00 : f32
      %32 = vector.broadcast %cst_24 : f32 to vector<8x128xf32>
      %33 = arith.addf %32, %31 : vector<8x128xf32>
      %34 = arith.divf %32, %33 : vector<8x128xf32>
      %35 = vector.extract_strided_slice %28 {offsets = [0, 128], sizes = [8, 128], strides = [1, 1]} : vector<8x512xf32> to vector<8x128xf32>
      %36 = arith.negf %35 : vector<8x128xf32>
      %37 = math.exp %36 : vector<8x128xf32>
      %cst_25 = arith.constant 1.000000e+00 : f32
      %38 = vector.broadcast %cst_25 : f32 to vector<8x128xf32>
      %39 = arith.addf %38, %37 : vector<8x128xf32>
      %40 = arith.divf %38, %39 : vector<8x128xf32>
      %41 = vector.extract_strided_slice %28 {offsets = [0, 256], sizes = [8, 128], strides = [1, 1]} : vector<8x512xf32> to vector<8x128xf32>
      %42 = math.tanh %41 : vector<8x128xf32>
      %43 = vector.extract_strided_slice %28 {offsets = [0, 384], sizes = [8, 128], strides = [1, 1]} : vector<8x512xf32> to vector<8x128xf32>
      %44 = arith.negf %43 : vector<8x128xf32>
      %45 = math.exp %44 : vector<8x128xf32>
      %cst_26 = arith.constant 1.000000e+00 : f32
      %46 = vector.broadcast %cst_26 : f32 to vector<8x128xf32>
      %47 = arith.addf %46, %45 : vector<8x128xf32>
      %48 = arith.divf %46, %47 : vector<8x128xf32>
      %49 = arith.mulf %40, %arg13 : vector<8x128xf32>
      %50 = arith.mulf %34, %42 : vector<8x128xf32>
      %51 = arith.addf %49, %50 : vector<8x128xf32>
      %52 = math.tanh %51 : vector<8x128xf32>
      %53 = arith.mulf %48, %52 : vector<8x128xf32>
      %cst_27 = arith.constant dense<0.000000e+00> : vector<8x128xf32>
      %54 = tpu.matmul %53, %3, %cst_27 {dimension_numbers = #tpu.dot_dimension_numbers<[1], [0], [0], [1], [0, 0, 1, 1], [], []>} : vector<8x128xf32>, vector<128x128xf32>, vector<8x128xf32> -> vector<8x128xf32>
      %55 = vector.broadcast %4 : vector<1x128xf32> to vector<8x128xf32>
      %56 = arith.addf %54, %55 : vector<8x128xf32>
      %57 = arith.index_cast %arg10 : i32 to index
      %c0_28 = arith.constant 0 : index
      %c0_29 = arith.constant 0 : index
      %58 = vector.load %arg9[%57, %c0_28, %c0_29] : memref<8x8x128xf32, #tpu.memory_space<vmem>>, vector<1x8x128xf32>
      %59 = vector.shape_cast %58 : vector<1x8x128xf32> to vector<8x128xf32>
      %60 = vector.shape_cast %56 : vector<8x128xf32> to vector<1x8x128xf32>
      tpu.vector_store %arg9[%57, %c0_28, %c0_29], %60 {strides = array<i32>} : memref<8x8x128xf32, #tpu.memory_space<vmem>>, vector<1x8x128xf32>,
      %c40_i32 = arith.constant 40 : i32
      %61 = vector.broadcast %c40_i32 : i32 to vector<8x128xi32>
      %62 = arith.cmpi slt, %6, %61 : vector<8x128xi32>
      %cst_30 = arith.constant -1.000000e+30 : f32
      %63 = vector.broadcast %cst_30 : f32 to vector<8x128xf32>
      %64 = arith.select %62, %56, %63 : vector<8x128xi1>, vector<8x128xf32>
      %cst_31 = arith.constant dense<0xFF800000> : vector<8xf32>
      %65 = vector.multi_reduction <maximumf>, %64, %cst_31 [1] : vector<8x128xf32> to vector<8xf32>
      %66 = vector.shape_cast %65 : vector<8xf32> to vector<8x1xf32>
      %67 = vector.broadcast %66 : vector<8x1xf32> to vector<8x128xf32>
      %68 = arith.cmpf oeq, %64, %67 : vector<8x128xf32>
      %c128_i32 = arith.constant 128 : i32
      %69 = vector.broadcast %c128_i32 : i32 to vector<8x128xi32>
      %70 = arith.select %68, %6, %69 : vector<8x128xi1>, vector<8x128xi32>
      %cst_32 = arith.constant dense<2147483647> : vector<8xi32>
      %71 = vector.multi_reduction <minsi>, %70, %cst_32 [1] : vector<8x128xi32> to vector<8xi32>
      %72 = vector.shape_cast %71 : vector<8xi32> to vector<8x1xi32>
      %73 = arith.index_cast %arg10 : i32 to index
      %74 = memref.load %arg1[%73] : memref<8xi32, #tpu.memory_space<smem>>
      %c0_i32_33 = arith.constant 0 : i32
      %75 = arith.cmpi sgt, %74, %c0_i32_33 : i32
      %76 = vector.broadcast %arg10 : i32 to vector<8x8xi32>
      %77 = arith.cmpi eq, %7, %76 : vector<8x8xi32>
      %c0_i32_34 = arith.constant 0 : i32
      %78 = vector.broadcast %c0_i32_34 : i32 to vector<8x8xi32>
      %79 = arith.select %77, %5, %78 : vector<8x8xi1>, vector<8x8xi32>
      %cst_35 = arith.constant dense<0> : vector<8xi32>
      %80 = vector.multi_reduction <add>, %79, %cst_35 [1] : vector<8x8xi32> to vector<8xi32>
      %81 = vector.shape_cast %80 : vector<8xi32> to vector<8x1xi32>
      %82 = arith.select %75, %81, %72 : vector<8x1xi32>
      scf.yield %82, %53, %51 : vector<8x1xi32>, vector<8x128xf32>, vector<8x128xf32>
    }
    %c7_i32_21 = arith.constant 7 : i32
    return
  }
}

</mosaic_0001>

<llo_original>
// kernel: seq2seq_forward.2
$region0: #{seq2seq_forward.2}
  #allocation0 [shape = 'u32[]', space=smem, size = 0x4, offset = 0x4, fixed_abs, tag = 'smem constant byte address 0x4 - core index']
  #allocation1 [shape = 'u32[144,128]{1,0:T(1,128)}', space=vmem, size = 0x12000, scoped, tag = 'internal scratch']
  #allocation2 [shape = 'f32[80,512]{1,0:T(8,128)}', space=vmem, size = 0x28000, scoped, tag = 'scratch operand']
  %s0 = inlined_call_operand.vmem [shape: f32[80,64], index: 0, kind: input, shape index: {}]
  %s1 = inlined_call_operand.vmem [shape: f32[64,512], index: 1, kind: input, shape index: {}]
  %s2 = inlined_call_operand.vmem [shape: f32[128,512], index: 2, kind: input, shape index: {}]
  %s3 = inlined_call_operand.vmem [shape: f32[1,512], index: 3, kind: input, shape index: {}]
  %s4 = inlined_call_operand.vmem [shape: f32[8,128], index: 4, kind: output, shape index: {0}]
  %s5 = inlined_call_operand.vmem [shape: f32[8,128], index: 5, kind: output, shape index: {1}]
  %6 = xla_tuple %s4, %s5
  %s7 = sld [smem:[#allocation0]]
  $region41: #{seq2seq_forward.2} parent=0
    _
  %s9 = ssub.s32 1, %s7
  %s10 = scalar_select 0, %s9, %s7
  // Predicated region
  $region2: #{seq2seq_forward.2} parent=0 // pred_check
    _
  $region3: #{seq2seq_forward.2} parent=0 // pred_check_branch
    %12 = sbr.rel (0) target = $region5
  $region4: #{seq2seq_forward.2} parent=0 // pred_region
    _
  $region5: #{seq2seq_forward.2} parent=0 // pred_fallthru
    _
  // Predicated region
  $region6: #{seq2seq_forward.2} parent=0 // pred_check
    _
  $region7: #{seq2seq_forward.2} parent=0 // pred_check_branch
    %14 = sbr.rel (0) target = $region9
  $region8: #{seq2seq_forward.2} parent=0 // pred_region
    _
  $region9: #{seq2seq_forward.2} parent=0 // pred_fallthru
    _
  // Predicated region
  $region10: #{seq2seq_forward.2} parent=0 // pred_check
    _
  $region11: #{seq2seq_forward.2} parent=0 // pred_check_branch
    %16 = sbr.rel (0) target = $region13
  $region12: #{seq2seq_forward.2} parent=0 // pred_region
    _
  $region13: #{seq2seq_forward.2} parent=0 // pred_fallthru
    _
  // Predicated region
  $region14: #{seq2seq_forward.2} parent=0 // pred_check
    _
  $region15: #{seq2seq_forward.2} parent=0 // pred_check_branch
    %18 = sbr.rel (0) target = $region17
  $region16: #{seq2seq_forward.2} parent=0 // pred_region
    _
  $region17: #{seq2seq_forward.2} parent=0 // pred_fallthru
    _
  %v19 = vld [vmem:[%s0] sm:$0xff]
  %v20 = vld [vmem:[%s0 + $0x8] sm:$0xff]
  %v21 = vld [vmem:[%s0 + $0x10] sm:$0xff]
  %v22 = vld [vmem:[%s0 + $0x18] sm:$0xff]
  %v23 = vld [vmem:[%s0 + $0x20] sm:$0xff]
  %v24 = vld [vmem:[%s0 + $0x28] sm:$0xff]
  %v25 = vld [vmem:[%s0 + $0x30] sm:$0xff]
  %v26 = vld [vmem:[%s0 + $0x38] sm:$0xff]
  %v27 = vld [vmem:[%s0 + $0x40] sm:$0xff]
  %v28 = vld [vmem:[%s0 + $0x48] sm:$0xff]
  %v29 = vld [vmem:[%s1] sm:$0xff]
  %v30 = vld [vmem:[%s1 + $0x8] sm:$0xff]
  %v31 = vld [vmem:[%s1 + $0x10] sm:$0xff]
  %v32 = vld [vmem:[%s1 + $0x18] sm:$0xff]
  %v33 = vld [vmem:[%s1 + $0x20] sm:$0xff]
  %v34 = vld [vmem:[%s1 + $0x28] sm:$0xff]
  %v35 = vld [vmem:[%s1 + $0x30] sm:$0xff]
  %v36 = vld [vmem:[%s1 + $0x38] sm:$0xff]
  %v37 = vld [vmem:[%s1 + $0x40] sm:$0xff]
  %v38 = vld [vmem:[%s1 + $0x48] sm:$0xff]
  %v39 = vld [vmem:[%s1 + $0x50] sm:$0xff]
  %v40 = vld [vmem:[%s1 + $0x58] sm:$0xff]
  %v41 = vld [vmem:[%s1 + $0x60] sm:$0xff]
  %v42 = vld [vmem:[%s1 + $0x68] sm:$0xff]
  %v43 = vld [vmem:[%s1 + $0x70] sm:$0xff]
  %v44 = vld [vmem:[%s1 + $0x78] sm:$0xff]
  %v45 = vld [vmem:[%s1 + $0x80] sm:$0xff]
  %v46 = vld [vmem:[%s1 + $0x88] sm:$0xff]
  %v47 = vld [vmem:[%s1 + $0x90] sm:$0xff]
  %v48 = vld [vmem:[%s1 + $0x98] sm:$0xff]
  %v49 = vld [vmem:[%s1 + $0xa0] sm:$0xff]
  %v50 = vld [vmem:[%s1 + $0xa8] sm:$0xff]
  %v51 = vld [vmem:[%s1 + $0xb0] sm:$0xff]
  %v52 = vld [vmem:[%s1 + $0xb8] sm:$0xff]
  %v53 = vld [vmem:[%s1 + $0xc0] sm:$0xff]
  %v54 = vld [vmem:[%s1 + $0xc8] sm:$0xff]
  %v55 = vld [vmem:[%s1 + $0xd0] sm:$0xff]
  %v56 = vld [vmem:[%s1 + $0xd8] sm:$0xff]
  %v57 = vld [vmem:[%s1 + $0xe0] sm:$0xff]
  %v58 = vld [vmem:[%s1 + $0xe8] sm:$0xff]
  %v59 = vld [vmem:[%s1 + $0xf0] sm:$0xff]
  %v60 = vld [vmem:[%s1 + $0xf8] sm:$0xff]
  %v61 = vld [vmem:[%s3] sm:$0xf]
  %v63 = vlaneseq
  %v64 = vshrl.u32 %v63, 7
  %v65 = vsub.s32 0, %v64
  %v66 = vrot.slane %v61, %v65
  %v67 = vlaneseq
  %v68 = vshrl.u32 %v67, 7
  %v69 = vsub.s32 1, %v68
  %v70 = vrot.slane %v61, %v69
  %v71 = vlaneseq
  %v72 = vshrl.u32 %v71, 7
  %v73 = vsub.s32 2, %v72
  %v74 = vrot.slane %v61, %v73
  %v75 = vlaneseq
  %v76 = vshrl.u32 %v75, 7
  %v77 = vsub.s32 3, %v76
  %v78 = vrot.slane %v61, %v77
  %vm83 = vcmask 523264
  %v85 = vsel %vm83, %v19, 0
  %v88 = vsel %vm83, %v20, 0
  %v91 = vsel %vm83, %v21, 0
  %v94 = vsel %vm83, %v22, 0
  %v97 = vsel %vm83, %v23, 0
  %v100 = vsel %vm83, %v24, 0
  %v103 = vsel %vm83, %v25, 0
  %v106 = vsel %vm83, %v26, 0
  %v109 = vsel %vm83, %v27, 0
  %v112 = vsel %vm83, %v28, 0
  %114 = vmatprep.subr.mxu0 %v30
  %115 = vmatpush1.msra.mxu0 %v29
  %116 = vmatprep.subr.mxu0 %v34
  %117 = vmatpush1.msra.mxu0 %v33
  %118 = vmatprep.subr.mxu0 %v38
  %119 = vmatpush1.msra.mxu0 %v37
  %120 = vmatprep.subr.mxu0 %v42
  %121 = vmatpush1.msra.mxu0 %v41
  %122 = vmatprep.subr.mxu0 %v46
  %123 = vmatpush1.msra.mxu0 %v45
  %124 = vmatprep.subr.mxu0 %v50
  %125 = vmatpush1.msra.mxu0 %v49
  %126 = vmatprep.subr.mxu0 %v54
  %127 = vmatpush1.msra.mxu0 %v53
  %128 = vmatprep.subr.mxu0 %v58
  %129 = vmatpush1.msra.mxu0 %v57
  %130 = vmatprep.subr.mxu0 0.0
  %131 = vmatpush1.msra.mxu0 0.0
  %132 = vmatprep.subr.mxu0 0.0
  %133 = vmatpush1.msra.mxu0 0.0
  %134 = vmatprep.subr.mxu0 0.0
  %135 = vmatpush1.msra.mxu0 0.0
  %136 = vmatprep.subr.mxu0 0.0
  %137 = vmatpush1.msra.mxu0 0.0
  %138 = vmatprep.subr.mxu0 0.0
  %139 = vmatpush1.msra.mxu0 0.0
  %140 = vmatprep.subr.mxu0 0.0
  %141 = vmatpush1.msra.mxu0 0.0
  %142 = vmatprep.subr.mxu0 0.0
  %143 = vmatpush1.msra.mxu0 0.0
  %144 = vmatprep.subr.mxu0 0.0
  %145 = vmatpush1.msra.mxu0 0.0
  %146 = vmatprep.subr.mxu0 0.0
  %147 = vmatpush1.msra.mxu0 0.0
  %148 = vmatprep.subr.mxu0 0.0
  %149 = vmatpush1.msra.mxu0 0.0
  %150 = vmatprep.subr.mxu0 0.0
  %151 = vmatpush1.msra.mxu0 0.0
  %152 = vmatprep.subr.mxu0 0.0
  %153 = vmatpush1.msra.mxu0 0.0
  %154 = vmatprep.subr.mxu0 0.0
  %155 = vmatpush1.msra.mxu0 0.0
  %156 = vmatprep.subr.mxu0 0.0
  %157 = vmatpush1.msra.mxu0 0.0
  %158 = vmatprep.subr.mxu0 0.0
  %159 = vmatpush1.msra.mxu0 0.0
  %160 = vmatprep.subr.mxu0 0.0
  %161 = vmatpush1.msra.mxu0 0.0
  %162 = vmatprep.subr.mxu0 0.0
  %163 = vmatpush1.msra.mxu0 0.0
  %164 = vmatprep.subr.mxu0 0.0
  %165 = vmatpush1.msra.mxu0 0.0
  %166 = vmatprep.subr.mxu0 0.0
  %167 = vmatpush1.msra.mxu0 0.0
  %168 = vmatprep.subr.mxu0 0.0
  %169 = vmatpush1.msra.mxu0 0.0
  %170 = vmatprep.subr.mxu0 0.0
  %171 = vmatpush1.msra.mxu0 0.0
  %172 = vmatprep.subr.mxu0 0.0
  %173 = vmatpush1.msra.mxu0 0.0
  %174 = vmatprep.subr.mxu0 0.0
  %175 = vmatpush1.msra.mxu0 0.0
  %176 = vmatprep.subr.mxu0 0.0
  %177 = vmatpush1.msra.mxu0 0.0
  %178 = vmatprep.mubr.f32.mxu0 0.0
  %179 = vmatmul.mubr.f32.gmra.mrb[0].mxu0 %v85
  %v180 = vpop.f32.mrb[0].mxu0
  %v181 = vadd.f32 %v66, %v180
  %v182 = vpop.f32.mrb[0].mxu0
  %v183 = vadd.f32 %v70, %v182
  %184 = vmatprep.mubr.f32.mxu0 0.0
  %185 = vmatmul.mubr.f32.gmra.mrb[0].mxu0 %v88
  %v186 = vpop.f32.mrb[0].mxu0
  %v187 = vadd.f32 %v66, %v186
  %v188 = vpop.f32.mrb[0].mxu0
  %v189 = vadd.f32 %v70, %v188
  %190 = vmatprep.mubr.f32.mxu0 0.0
  %191 = vmatmul.mubr.f32.gmra.mrb[0].mxu0 %v91
  %v192 = vpop.f32.mrb[0].mxu0
  %v193 = vadd.f32 %v66, %v192
  %v194 = vpop.f32.mrb[0].mxu0
  %v195 = vadd.f32 %v70, %v194
  %196 = vmatprep.mubr.f32.mxu0 0.0
  %197 = vmatmul.mubr.f32.gmra.mrb[0].mxu0 %v94
  %v198 = vpop.f32.mrb[0].mxu0
  %v199 = vadd.f32 %v66, %v198
  %v200 = vpop.f32.mrb[0].mxu0
  %v201 = vadd.f32 %v70, %v200
  %202 = vmatprep.mubr.f32.mxu0 0.0
  %203 = vmatmul.mubr.f32.gmra.mrb[0].mxu0 %v97
  %v204 = vpop.f32.mrb[0].mxu0
  %v205 = vadd.f32 %v66, %v204
  %v206 = vpop.f32.mrb[0].mxu0
  %v207 = vadd.f32 %v70, %v206
  %208 = vmatprep.mubr.f32.mxu0 0.0
  %209 = vmatmul.mubr.f32.gmra.mrb[0].mxu0 %v100
  %v210 = vpop.f32.mrb[0].mxu0
  %v211 = vadd.f32 %v66, %v210
  %v212 = vpop.f32.mrb[0].mxu0
  %v213 = vadd.f32 %v70, %v212
  %214 = vmatprep.mubr.f32.mxu0 0.0
  %215 = vmatmul.mubr.f32.gmra.mrb[0].mxu0 %v103
  %v216 = vpop.f32.mrb[0].mxu0
  %v217 = vadd.f32 %v66, %v216
  %v218 = vpop.f32.mrb[0].mxu0
  %v219 = vadd.f32 %v70, %v218
  %220 = vmatprep.mubr.f32.mxu0 0.0
  %221 = vmatmul.mubr.f32.gmra.mrb[0].mxu0 %v106
  %v222 = vpop.f32.mrb[0].mxu0
  %v223 = vadd.f32 %v66, %v222
  %v224 = vpop.f32.mrb[0].mxu0
  %v225 = vadd.f32 %v70, %v224
  %226 = vmatprep.mubr.f32.mxu0 0.0
  %227 = vmatmul.mubr.f32.gmra.mrb[0].mxu0 %v109
  %v228 = vpop.f32.mrb[0].mxu0
  %v229 = vadd.f32 %v66, %v228
  %v230 = vpop.f32.mrb[0].mxu0
  %v231 = vadd.f32 %v70, %v230
  %232 = vmatprep.mubr.f32.mxu0 0.0
  %233 = vmatmul.mubr.f32.gmra.mrb[0].mxu0 %v112
  %v234 = vpop.f32.mrb[0].mxu0
  %v235 = vadd.f32 %v66, %v234
  %v236 = vpop.f32.mrb[0].mxu0
  %v237 = vadd.f32 %v70, %v236
  %238 = vdwg.mxu0
  %239 = vmatprep.subr.mxu0 %v32
  %240 = vmatpush1.msra.mxu0 %v31
  %241 = vmatprep.subr.mxu0 %v36
  %242 = vmatpush1.msra.mxu0 %v35
  %243 = vmatprep.subr.mxu0 %v40
  %244 = vmatpush1.msra.mxu0 %v39
  %245 = vmatprep.subr.mxu0 %v44
  %246 = vmatpush1.msra.mxu0 %v43
  %247 = vmatprep.subr.mxu0 %v48
  %248 = vmatpush1.msra.mxu0 %v47
  %249 = vmatprep.subr.mxu0 %v52
  %250 = vmatpush1.msra.mxu0 %v51
  %251 = vmatprep.subr.mxu0 %v56
  %252 = vmatpush1.msra.mxu0 %v55
  %253 = vmatprep.subr.mxu0 %v60
  %254 = vmatpush1.msra.mxu0 %v59
  %255 = vmatprep.subr.mxu0 0.0
  %256 = vmatpush1.msra.mxu0 0.0
  %257 = vmatprep.subr.mxu0 0.0
  %258 = vmatpush1.msra.mxu0 0.0
  %259 = vmatprep.subr.mxu0 0.0
  %260 = vmatpush1.msra.mxu0 0.0
  %261 = vmatprep.subr.mxu0 0.0
  %262 = vmatpush1.msra.mxu0 0.0
  %263 = vmatprep.subr.mxu0 0.0
  %264 = vmatpush1.msra.mxu0 0.0
  %265 = vmatprep.subr.mxu0 0.0
  %266 = vmatpush1.msra.mxu0 0.0
  %267 = vmatprep.subr.mxu0 0.0
  %268 = vmatpush1.msra.mxu0 0.0
  %269 = vmatprep.subr.mxu0 0.0
  %270 = vmatpush1.msra.mxu0 0.0
  %271 = vmatprep.subr.mxu0 0.0
  %272 = vmatpush1.msra.mxu0 0.0
  %273 = vmatprep.subr.mxu0 0.0
  %274 = vmatpush1.msra.mxu0 0.0
  %275 = vmatprep.subr.mxu0 0.0
  %276 = vmatpush1.msra.mxu0 0.0
  %277 = vmatprep.subr.mxu0 0.0
  %278 = vmatpush1.msra.mxu0 0.0
  %279 = vmatprep.subr.mxu0 0.0
  %280 = vmatpush1.msra.mxu0 0.0
  %281 = vmatprep.subr.mxu0 0.0
  %282 = vmatpush1.msra.mxu0 0.0
  %283 = vmatprep.subr.mxu0 0.0
  %284 = vmatpush1.msra.mxu0 0.0
  %285 = vmatprep.subr.mxu0 0.0
  %286 = vmatpush1.msra.mxu0 0.0
  %287 = vmatprep.subr.mxu0 0.0
  %288 = vmatpush1.msra.mxu0 0.0
  %289 = vmatprep.subr.mxu0 0.0
  %290 = vmatpush1.msra.mxu0 0.0
  %291 = vmatprep.subr.mxu0 0.0
  %292 = vmatpush1.msra.mxu0 0.0
  %293 = vmatprep.subr.mxu0 0.0
  %294 = vmatpush1.msra.mxu0 0.0
  %295 = vmatprep.subr.mxu0 0.0
  %296 = vmatpush1.msra.mxu0 0.0
  %297 = vmatprep.subr.mxu0 0.0
  %298 = vmatpush1.msra.mxu0 0.0
  %299 = vmatprep.subr.mxu0 0.0
  %300 = vmatpush1.msra.mxu0 0.0
  %301 = vmatprep.subr.mxu0 0.0
  %302 = vmatpush1.msra.mxu0 0.0
  %303 = vmatprep.mubr.f32.mxu0 0.0
  %304 = vmatmul.mubr.f32.gmra.mrb[0].mxu0 %v85
  %v305 = vpop.f32.mrb[0].mxu0
  %v306 = vadd.f32 %v74, %v305
  %v307 = vpop.f32.mrb[0].mxu0
  %v308 = vadd.f32 %v78, %v307
  %309 = vmatprep.mubr.f32.mxu0 0.0
  %310 = vmatmul.mubr.f32.gmra.mrb[0].mxu0 %v88
  %v311 = vpop.f32.mrb[0].mxu0
  %v312 = vadd.f32 %v74, %v311
  %v313 = vpop.f32.mrb[0].mxu0
  %v314 = vadd.f32 %v78, %v313
  %315 = vmatprep.mubr.f32.mxu0 0.0
  %316 = vmatmul.mubr.f32.gmra.mrb[0].mxu0 %v91
  %v317 = vpop.f32.mrb[0].mxu0
  %v318 = vadd.f32 %v74, %v317
  %v319 = vpop.f32.mrb[0].mxu0
  %v320 = vadd.f32 %v78, %v319
  %321 = vmatprep.mubr.f32.mxu0 0.0
  %322 = vmatmul.mubr.f32.gmra.mrb[0].mxu0 %v94
  %v323 = vpop.f32.mrb[0].mxu0
  %v324 = vadd.f32 %v74, %v323
  %v325 = vpop.f32.mrb[0].mxu0
  %v326 = vadd.f32 %v78, %v325
  %327 = vmatprep.mubr.f32.mxu0 0.0
  %328 = vmatmul.mubr.f32.gmra.mrb[0].mxu0 %v97
  %v329 = vpop.f32.mrb[0].mxu0
  %v330 = vadd.f32 %v74, %v329
  %v331 = vpop.f32.mrb[0].mxu0
  %v332 = vadd.f32 %v78, %v331
  %333 = vmatprep.mubr.f32.mxu0 0.0
  %334 = vmatmul.mubr.f32.gmra.mrb[0].mxu0 %v100
  %v335 = vpop.f32.mrb[0].mxu0
  %v336 = vadd.f32 %v74, %v335
  %v337 = vpop.f32.mrb[0].mxu0
  %v338 = vadd.f32 %v78, %v337
  %339 = vmatprep.mubr.f32.mxu0 0.0
  %340 = vmatmul.mubr.f32.gmra.mrb[0].mxu0 %v103
  %v341 = vpop.f32.mrb[0].mxu0
  %v342 = vadd.f32 %v74, %v341
  %v343 = vpop.f32.mrb[0].mxu0
  %v344 = vadd.f32 %v78, %v343
  %345 = vmatprep.mubr.f32.mxu0 0.0
  %346 = vmatmul.mubr.f32.gmra.mrb[0].mxu0 %v106
  %v347 = vpop.f32.mrb[0].mxu0
  %v348 = vadd.f32 %v74, %v347
  %v349 = vpop.f32.mrb[0].mxu0
  %v350 = vadd.f32 %v78, %v349
  %351 = vmatprep.mubr.f32.mxu0 0.0
  %352 = vmatmul.mubr.f32.gmra.mrb[0].mxu0 %v109
  %v353 = vpop.f32.mrb[0].mxu0
  %v354 = vadd.f32 %v74, %v353
  %v355 = vpop.f32.mrb[0].mxu0
  %v356 = vadd.f32 %v78, %v355
  %357 = vmatprep.mubr.f32.mxu0 0.0
  %358 = vmatmul.mubr.f32.gmra.mrb[0].mxu0 %v112
  %v359 = vpop.f32.mrb[0].mxu0
  %v360 = vadd.f32 %v74, %v359
  %v361 = vpop.f32.mrb[0].mxu0
  %v362 = vadd.f32 %v78, %v361
  %363 = vdwg.mxu0
  %364 = vst [vmem:[#allocation2] sm:$0xff] %v181
  %365 = vst [vmem:[#allocation2 + $0x8] sm:$0xff] %v183
  %366 = vst [vmem:[#allocation2 + $0x10] sm:$0xff] %v306
  %367 = vst [vmem:[#allocation2 + $0x18] sm:$0xff] %v308
  %368 = vst [vmem:[#allocation2 + $0x20] sm:$0xff] %v187
  %369 = vst [vmem:[#allocation2 + $0x28] sm:$0xff] %v189
  %370 = vst [vmem:[#allocation2 + $0x30] sm:$0xff] %v312
  %371 = vst [vmem:[#allocation2 + $0x38] sm:$0xff] %v314
  %372 = vst [vmem:[#allocation2 + $0x40] sm:$0xff] %v193
  %373 = vst [vmem:[#allocation2 + $0x48] sm:$0xff] %v195
  %374 = vst [vmem:[#allocation2 + $0x50] sm:$0xff] %v318
  %375 = vst [vmem:[#allocation2 + $0x58] sm:$0xff] %v320
  %376 = vst [vmem:[#allocation2 + $0x60] sm:$0xff] %v199
  %377 = vst [vmem:[#allocation2 + $0x68] sm:$0xff] %v201
  %378 = vst [vmem:[#allocation2 + $0x70] sm:$0xff] %v324
  %379 = vst [vmem:[#allocation2 + $0x78] sm:$0xff] %v326
  %380 = vst [vmem:[#allocation2 + $0x80] sm:$0xff] %v205
  %381 = vst [vmem:[#allocation2 + $0x88] sm:$0xff] %v207
  %382 = vst [vmem:[#allocation2 + $0x90] sm:$0xff] %v330
  %383 = vst [vmem:[#allocation2 + $0x98] sm:$0xff] %v332
  %384 = vst [vmem:[#allocation2 + $0xa0] sm:$0xff] %v211
  %385 = vst [vmem:[#allocation2 + $0xa8] sm:$0xff] %v213
  %386 = vst [vmem:[#allocation2 + $0xb0] sm:$0xff] %v336
  %387 = vst [vmem:[#allocation2 + $0xb8] sm:$0xff] %v338
  %388 = vst [vmem:[#allocation2 + $0xc0] sm:$0xff] %v217
  %389 = vst [vmem:[#allocation2 + $0xc8] sm:$0xff] %v219
  %390 = vst [vmem:[#allocation2 + $0xd0] sm:$0xff] %v342
  %391 = vst [vmem:[#allocation2 + $0xd8] sm:$0xff] %v344
  %392 = vst [vmem:[#allocation2 + $0xe0] sm:$0xff] %v223
  %393 = vst [vmem:[#allocation2 + $0xe8] sm:$0xff] %v225
  %394 = vst [vmem:[#allocation2 + $0xf0] sm:$0xff] %v348
  %395 = vst [vmem:[#allocation2 + $0xf8] sm:$0xff] %v350
  %396 = vst [vmem:[#allocation2 + $0x100] sm:$0xff] %v229
  %397 = vst [vmem:[#allocation2 + $0x108] sm:$0xff] %v231
  %398 = vst [vmem:[#allocation2 + $0x110] sm:$0xff] %v354
  %399 = vst [vmem:[#allocation2 + $0x118] sm:$0xff] %v356
  %400 = vst [vmem:[#allocation2 + $0x120] sm:$0xff] %v235
  %401 = vst [vmem:[#allocation2 + $0x128] sm:$0xff] %v237
  %402 = vst [vmem:[#allocation2 + $0x130] sm:$0xff] %v360
  %403 = vst [vmem:[#allocation2 + $0x138] sm:$0xff] %v362
  %v404 = vld [vmem:[%s2] sm:$0xff]
  %v405 = vld [vmem:[%s2 + $0x8] sm:$0xff]
  %v406 = vld [vmem:[%s2 + $0x10] sm:$0xff]
  %v407 = vld [vmem:[%s2 + $0x18] sm:$0xff]
  %v408 = vld [vmem:[%s2 + $0x20] sm:$0xff]
  %v409 = vld [vmem:[%s2 + $0x28] sm:$0xff]
  %v410 = vld [vmem:[%s2 + $0x30] sm:$0xff]
  %v411 = vld [vmem:[%s2 + $0x38] sm:$0xff]
  %v412 = vld [vmem:[%s2 + $0x40] sm:$0xff]
  %v413 = vld [vmem:[%s2 + $0x48] sm:$0xff]
  %v414 = vld [vmem:[%s2 + $0x50] sm:$0xff]
  %v415 = vld [vmem:[%s2 + $0x58] sm:$0xff]
  %v416 = vld [vmem:[%s2 + $0x60] sm:$0xff]
  %v417 = vld [vmem:[%s2 + $0x68] sm:$0xff]
  %v418 = vld [vmem:[%s2 + $0x70] sm:$0xff]
  %v419 = vld [vmem:[%s2 + $0x78] sm:$0xff]
  %v420 = vld [vmem:[%s2 + $0x80] sm:$0xff]
  %v421 = vld [vmem:[%s2 + $0x88] sm:$0xff]
  %v422 = vld [vmem:[%s2 + $0x90] sm:$0xff]
  %v423 = vld [vmem:[%s2 + $0x98] sm:$0xff]
  %v424 = vld [vmem:[%s2 + $0xa0] sm:$0xff]
  %v425 = vld [vmem:[%s2 + $0xa8] sm:$0xff]
  %v426 = vld [vmem:[%s2 + $0xb0] sm:$0xff]
  %v427 = vld [vmem:[%s2 + $0xb8] sm:$0xff]
  %v428 = vld [vmem:[%s2 + $0xc0] sm:$0xff]
  %v429 = vld [vmem:[%s2 + $0xc8] sm:$0xff]
  %v430 = vld [vmem:[%s2 + $0xd0] sm:$0xff]
  %v431 = vld [vmem:[%s2 + $0xd8] sm:$0xff]
  %v432 = vld [vmem:[%s2 + $0xe0] sm:$0xff]
  %v433 = vld [vmem:[%s2 + $0xe8] sm:$0xff]
  %v434 = vld [vmem:[%s2 + $0xf0] sm:$0xff]
  %v435 = vld [vmem:[%s2 + $0xf8] sm:$0xff]
  %v436 = vld [vmem:[%s2 + $0x100] sm:$0xff]
  %v437 = vld [vmem:[%s2 + $0x108] sm:$0xff]
  %v438 = vld [vmem:[%s2 + $0x110] sm:$0xff]
  %v439 = vld [vmem:[%s2 + $0x118] sm:$0xff]
  %v440 = vld [vmem:[%s2 + $0x120] sm:$0xff]
  %v441 = vld [vmem:[%s2 + $0x128] sm:$0xff]
  %v442 = vld [vmem:[%s2 + $0x130] sm:$0xff]
  %v443 = vld [vmem:[%s2 + $0x138] sm:$0xff]
  %v444 = vld [vmem:[%s2 + $0x140] sm:$0xff]
  %v445 = vld [vmem:[%s2 + $0x148] sm:$0xff]
  %v446 = vld [vmem:[%s2 + $0x150] sm:$0xff]
  %v447 = vld [vmem:[%s2 + $0x158] sm:$0xff]
  %v448 = vld [vmem:[%s2 + $0x160] sm:$0xff]
  %v449 = vld [vmem:[%s2 + $0x168] sm:$0xff]
  %v450 = vld [vmem:[%s2 + $0x170] sm:$0xff]
  %v451 = vld [vmem:[%s2 + $0x178] sm:$0xff]
  %v452 = vld [vmem:[%s2 + $0x180] sm:$0xff]
  %v453 = vld [vmem:[%s2 + $0x188] sm:$0xff]
  %v454 = vld [vmem:[%s2 + $0x190] sm:$0xff]
  %v455 = vld [vmem:[%s2 + $0x198] sm:$0xff]
  %v456 = vld [vmem:[%s2 + $0x1a0] sm:$0xff]
  %v457 = vld [vmem:[%s2 + $0x1a8] sm:$0xff]
  %v458 = vld [vmem:[%s2 + $0x1b0] sm:$0xff]
  %v459 = vld [vmem:[%s2 + $0x1b8] sm:$0xff]
  %v460 = vld [vmem:[%s2 + $0x1c0] sm:$0xff]
  %v461 = vld [vmem:[%s2 + $0x1c8] sm:$0xff]
  %v462 = vld [vmem:[%s2 + $0x1d0] sm:$0xff]
  %v463 = vld [vmem:[%s2 + $0x1d8] sm:$0xff]
  %v464 = vld [vmem:[%s2 + $0x1e0] sm:$0xff]
  %v465 = vld [vmem:[%s2 + $0x1e8] sm:$0xff]
  %v466 = vld [vmem:[%s2 + $0x1f0] sm:$0xff]
  %v467 = vld [vmem:[%s2 + $0x1f8] sm:$0xff]
  loop: start=0, step=1, limit=10
  $region18: #{seq2seq_forward.2} parent=0 // loop_pre_header
    _
  $region19: #{seq2seq_forward.2} parent=0 // loop_header
    %s469 = sphi 0, %s473
    %p470 = scmp.ge.s32.totalorder %s469, 10
    %v474 = vphi 0.0, %v655
    %v475 = vphi 0.0, %v653
  $region20: #{seq2seq_forward.2} parent=0 // loop_header_branch
    %472 = sbr.rel (%p470) target = $region24
  $region21: #{seq2seq_forward.2} parent=0 // loop_body
    %s476 = smul.u32 %s469, 8
    %s477 = sshra.s32 %s476, 3
    %s478 = sand.u32 %s476, 7
    %s479 = smul.u32 %s477, 4
    %s480 = smul.addr %s479, 8
    %s481 = scalar_lea.vmem [#allocation2], %s480
    %v482 = vld [vmem:[%s481] sm:$0xff]
    %v483 = vld [vmem:[%s481 + $0x8] sm:$0xff]
    %v484 = vld [vmem:[%s481 + $0x10] sm:$0xff]
    %v485 = vld [vmem:[%s481 + $0x18] sm:$0xff]
    %486 = vmatprep.subr.mxu0 %v405
    %487 = vmatpush1.msra.mxu0 %v404
    %488 = vmatprep.subr.mxu0 %v409
    %489 = vmatpush1.msra.mxu0 %v408
    %490 = vmatprep.subr.mxu0 %v413
    %491 = vmatpush1.msra.mxu0 %v412
    %492 = vmatprep.subr.mxu0 %v417
    %493 = vmatpush1.msra.mxu0 %v416
    %494 = vmatprep.subr.mxu0 %v421
    %495 = vmatpush1.msra.mxu0 %v420
    %496 = vmatprep.subr.mxu0 %v425
    %497 = vmatpush1.msra.mxu0 %v424
    %498 = vmatprep.subr.mxu0 %v429
    %499 = vmatpush1.msra.mxu0 %v428
    %500 = vmatprep.subr.mxu0 %v433
    %501 = vmatpush1.msra.mxu0 %v432
    %502 = vmatprep.subr.mxu0 %v437
    %503 = vmatpush1.msra.mxu0 %v436
    %504 = vmatprep.subr.mxu0 %v441
    %505 = vmatpush1.msra.mxu0 %v440
    %506 = vmatprep.subr.mxu0 %v445
    %507 = vmatpush1.msra.mxu0 %v444
    %508 = vmatprep.subr.mxu0 %v449
    %509 = vmatpush1.msra.mxu0 %v448
    %510 = vmatprep.subr.mxu0 %v453
    %511 = vmatpush1.msra.mxu0 %v452
    %512 = vmatprep.subr.mxu0 %v457
    %513 = vmatpush1.msra.mxu0 %v456
    %514 = vmatprep.subr.mxu0 %v461
    %515 = vmatpush1.msra.mxu0 %v460
    %516 = vmatprep.subr.mxu0 %v465
    %517 = vmatpush1.msra.mxu0 %v464
    %518 = vmatprep.subr.mxu0 0.0
    %519 = vmatpush1.msra.mxu0 0.0
    %520 = vmatprep.subr.mxu0 0.0
    %521 = vmatpush1.msra.mxu0 0.0
    %522 = vmatprep.subr.mxu0 0.0
    %523 = vmatpush1.msra.mxu0 0.0
    %524 = vmatprep.subr.mxu0 0.0
    %525 = vmatpush1.msra.mxu0 0.0
    %526 = vmatprep.subr.mxu0 0.0
    %527 = vmatpush1.msra.mxu0 0.0
    %528 = vmatprep.subr.mxu0 0.0
    %529 = vmatpush1.msra.mxu0 0.0
    %530 = vmatprep.subr.mxu0 0.0
    %531 = vmatpush1.msra.mxu0 0.0
    %532 = vmatprep.subr.mxu0 0.0
    %533 = vmatpush1.msra.mxu0 0.0
    %534 = vmatprep.subr.mxu0 0.0
    %535 = vmatpush1.msra.mxu0 0.0
    %536 = vmatprep.subr.mxu0 0.0
    %537 = vmatpush1.msra.mxu0 0.0
    %538 = vmatprep.subr.mxu0 0.0
    %539 = vmatpush1.msra.mxu0 0.0
    %540 = vmatprep.subr.mxu0 0.0
    %541 = vmatpush1.msra.mxu0 0.0
    %542 = vmatprep.subr.mxu0 0.0
    %543 = vmatpush1.msra.mxu0 0.0
    %544 = vmatprep.subr.mxu0 0.0
    %545 = vmatpush1.msra.mxu0 0.0
    %546 = vmatprep.subr.mxu0 0.0
    %547 = vmatpush1.msra.mxu0 0.0
    %548 = vmatprep.subr.mxu0 0.0
    %549 = vmatpush1.msra.mxu0 0.0
    %550 = vmatprep.mubr.f32.mxu0 0.0
    %551 = vmatmul.mubr.f32.gmra.mrb[0].mxu0 %v474
    %v552 = vpop.f32.mrb[0].mxu0
    %v553 = vadd.f32 0.0, %v552
    %v554 = vpop.f32.mrb[0].mxu0
    %v555 = vadd.f32 0.0, %v554
    %556 = vdwg.mxu0
    %557 = vmatprep.subr.mxu0 %v407
    %558 = vmatpush1.msra.mxu0 %v406
    %559 = vmatprep.subr.mxu0 %v411
    %560 = vmatpush1.msra.mxu0 %v410
    %561 = vmatprep.subr.mxu0 %v415
    %562 = vmatpush1.msra.mxu0 %v414
    %563 = vmatprep.subr.mxu0 %v419
    %564 = vmatpush1.msra.mxu0 %v418
    %565 = vmatprep.subr.mxu0 %v423
    %566 = vmatpush1.msra.mxu0 %v422
    %567 = vmatprep.subr.mxu0 %v427
    %568 = vmatpush1.msra.mxu0 %v426
    %569 = vmatprep.subr.mxu0 %v431
    %570 = vmatpush1.msra.mxu0 %v430
    %571 = vmatprep.subr.mxu0 %v435
    %572 = vmatpush1.msra.mxu0 %v434
    %573 = vmatprep.subr.mxu0 %v439
    %574 = vmatpush1.msra.mxu0 %v438
    %575 = vmatprep.subr.mxu0 %v443
    %576 = vmatpush1.msra.mxu0 %v442
    %577 = vmatprep.subr.mxu0 %v447
    %578 = vmatpush1.msra.mxu0 %v446
    %579 = vmatprep.subr.mxu0 %v451
    %580 = vmatpush1.msra.mxu0 %v450
    %581 = vmatprep.subr.mxu0 %v455
    %582 = vmatpush1.msra.mxu0 %v454
    %583 = vmatprep.subr.mxu0 %v459
    %584 = vmatpush1.msra.mxu0 %v458
    %585 = vmatprep.subr.mxu0 %v463
    %586 = vmatpush1.msra.mxu0 %v462
    %587 = vmatprep.subr.mxu0 %v467
    %588 = vmatpush1.msra.mxu0 %v466
    %589 = vmatprep.subr.mxu0 0.0
    %590 = vmatpush1.msra.mxu0 0.0
    %591 = vmatprep.subr.mxu0 0.0
    %592 = vmatpush1.msra.mxu0 0.0
    %593 = vmatprep.subr.mxu0 0.0
    %594 = vmatpush1.msra.mxu0 0.0
    %595 = vmatprep.subr.mxu0 0.0
    %596 = vmatpush1.msra.mxu0 0.0
    %597 = vmatprep.subr.mxu0 0.0
    %598 = vmatpush1.msra.mxu0 0.0
    %599 = vmatprep.subr.mxu0 0.0
    %600 = vmatpush1.msra.mxu0 0.0
    %601 = vmatprep.subr.mxu0 0.0
    %602 = vmatpush1.msra.mxu0 0.0
    %603 = vmatprep.subr.mxu0 0.0
    %604 = vmatpush1.msra.mxu0 0.0
    %605 = vmatprep.subr.mxu0 0.0
    %606 = vmatpush1.msra.mxu0 0.0
    %607 = vmatprep.subr.mxu0 0.0
    %608 = vmatpush1.msra.mxu0 0.0
    %609 = vmatprep.subr.mxu0 0.0
    %610 = vmatpush1.msra.mxu0 0.0
    %611 = vmatprep.subr.mxu0 0.0
    %612 = vmatpush1.msra.mxu0 0.0
    %613 = vmatprep.subr.mxu0 0.0
    %614 = vmatpush1.msra.mxu0 0.0
    %615 = vmatprep.subr.mxu0 0.0
    %616 = vmatpush1.msra.mxu0 0.0
    %617 = vmatprep.subr.mxu0 0.0
    %618 = vmatpush1.msra.mxu0 0.0
    %619 = vmatprep.subr.mxu0 0.0
    %620 = vmatpush1.msra.mxu0 0.0
    %621 = vmatprep.mubr.f32.mxu0 0.0
    %622 = vmatmul.mubr.f32.gmra.mrb[0].mxu0 %v474
    %v623 = vpop.f32.mrb[0].mxu0
    %v624 = vadd.f32 0.0, %v623
    %v625 = vpop.f32.mrb[0].mxu0
    %v626 = vadd.f32 0.0, %v625
    %627 = vdwg.mxu0
    %v628 = vadd.f32 %v482, %v553
    %v629 = vadd.f32 %v483, %v555
    %v630 = vadd.f32 %v484, %v624
    %v631 = vadd.f32 %v485, %v626
    %v632 = vxor.u32 %v628, 2147483648
    %v633 = vmul.f32 %v632, 1.442695
    %v634 = vpow.pop %v633
    %v635 = vadd.f32 %v634, 1.0
    %v636 = vrcp.pop %v635
    %v637 = vmul.f32 1.0, %v636
    %v638 = vxor.u32 %v629, 2147483648
    %v639 = vmul.f32 %v638, 1.442695
    %v640 = vpow.pop %v639
    %v641 = vadd.f32 %v640, 1.0
    %v642 = vrcp.pop %v641
    %v643 = vmul.f32 1.0, %v642
    %v644 = vtanh.pop %v630
    %v645 = vxor.u32 %v631, 2147483648
    %v646 = vmul.f32 %v645, 1.442695
    %v647 = vpow.pop %v646
    %v648 = vadd.f32 %v647, 1.0
    %v649 = vrcp.pop %v648
    %v650 = vmul.f32 1.0, %v649
    %v651 = vmul.f32 %v643, %v475
    %v652 = vmul.f32 %v637, %v644
    %v653 = vadd.f32 %v651, %v652
    %v654 = vtanh.pop %v653
    %v655 = vmul.f32 %v650, %v654
  $region22: #{seq2seq_forward.2} parent=0 // loop_footer
    %s473 = sadd.s32 1, %s469
  $region23: #{seq2seq_forward.2} parent=0 // loop_footer_branch
    %468 = sbr.rel target = $region19
  $region24: #{seq2seq_forward.2} parent=0 // loop_exit
    _
  %656 = vst [vmem:[%s4] sm:$0xff] %v474
  %657 = vst [vmem:[%s5] sm:$0xff] %v475
  // Predicated region
  $region25: #{seq2seq_forward.2} parent=0 // pred_check
    _
  $region26: #{seq2seq_forward.2} parent=0 // pred_check_branch
    %659 = sbr.rel (0) target = $region28
  $region27: #{seq2seq_forward.2} parent=0 // pred_region
    _
  $region28: #{seq2seq_forward.2} parent=0 // pred_fallthru
    _
  // Predicated region
  $region29: #{seq2seq_forward.2} parent=0 // pred_check
    _
  $region30: #{seq2seq_forward.2} parent=0 // pred_check_branch
    %661 = sbr.rel (0) target = $region32
  $region31: #{seq2seq_forward.2} parent=0 // pred_region
    _
  $region32: #{seq2seq_forward.2} parent=0 // pred_fallthru
    _
  // Predicated region
  $region33: #{seq2seq_forward.2} parent=0 // pred_check
    _
  $region34: #{seq2seq_forward.2} parent=0 // pred_check_branch
    %663 = sbr.rel (0) target = $region36
  $region35: #{seq2seq_forward.2} parent=0 // pred_region
    _
  $region36: #{seq2seq_forward.2} parent=0 // pred_fallthru
    _
  // Predicated region
  $region37: #{seq2seq_forward.2} parent=0 // pred_check
    _
  $region38: #{seq2seq_forward.2} parent=0 // pred_check_branch
    %665 = sbr.rel (0) target = $region40
  $region39: #{seq2seq_forward.2} parent=0 // pred_region
    _
  $region40: #{seq2seq_forward.2} parent=0 // pred_fallthru
    _

// kernel: seq2seq_forward.3
$region0: #{seq2seq_forward.3}
  #allocation0 [shape = 'u32[]', space=smem, size = 0x4, offset = 0x4, fixed_abs, tag = 'smem constant byte address 0x4 - core index']
  #allocation1 [shape = 'u32[144,128]{1,0:T(1,128)}', space=vmem, size = 0x12000, scoped, tag = 'internal scratch']
  %s0 = inlined_call_operand.vmem [shape: s32[8,8], index: 0, kind: input, shape index: {}]
  %s1 = inlined_call_operand.vmem [shape: s32[8], index: 1, kind: input, shape index: {}]
  %s2 = inlined_call_operand.vmem [shape: f32[8,128], index: 2, kind: input, shape index: {}]
  %s3 = inlined_call_operand.vmem [shape: f32[8,128], index: 3, kind: input, shape index: {}]
  %s4 = inlined_call_operand.vmem [shape: f32[128,32], index: 4, kind: input, shape index: {}]
  %s5 = inlined_call_operand.vmem [shape: f32[160,512], index: 5, kind: input, shape index: {}]
  %s6 = inlined_call_operand.vmem [shape: f32[1,512], index: 6, kind: input, shape index: {}]
  %s7 = inlined_call_operand.vmem [shape: f32[128,128], index: 7, kind: input, shape index: {}]
  %s8 = inlined_call_operand.vmem [shape: f32[1,128], index: 8, kind: input, shape index: {}]
  %s9 = inlined_call_operand.vmem [shape: f32[8,8,128], index: 9, kind: output, shape index: {}]
  %s10 = sld [smem:[#allocation0]]
  $region57: #{seq2seq_forward.3} parent=0
    _
  %s12 = ssub.s32 1, %s10
  %s13 = scalar_select 0, %s12, %s10
  $region1: #{seq2seq_forward.3} parent=0
    #allocation2 [shape = 'u8[512]{0}', space=smem, size = 0x200, scoped, tag = 'input window, operand 1, single buffered']
    #allocation3 [shape = 's32[1]{0}', space=sflag, size = 0x4, scoped, tag = 'scoped memory for seq2seq_forward.3']
    %14 = vsyncpa [#allocation3], 0
    // Predicated region
    $region2: #{seq2seq_forward.3} parent=1 // pred_check
      _
    $region3: #{seq2seq_forward.3} parent=1 // pred_check_branch
      %16 = sbr.rel (0) target = $region5
    $region4: #{seq2seq_forward.3} parent=1 // pred_region
      _
    $region5: #{seq2seq_forward.3} parent=1 // pred_fallthru
      _
    // Predicated region
    $region6: #{seq2seq_forward.3} parent=1 // pred_check
      _
    $region7: #{seq2seq_forward.3} parent=1 // pred_check_branch
      %18 = sbr.rel (0) target = $region9
    $region8: #{seq2seq_forward.3} parent=1 // pred_region
      %s20 = ssub.s32 16, 16
      %21 = vsyncadd [#allocation3], %s20
      %s23 = sshll.u32 %s1, 4
      %s24 = int_to_ptr.vmem [resolvable:$true] %s23
      %26 = dma.vmem_to_smem %s24, 16, [#allocation2], [#allocation3]
    $region9: #{seq2seq_forward.3} parent=1 // pred_fallthru
      _
    // Predicated region
    $region10: #{seq2seq_forward.3} parent=1 // pred_check
      _
    $region11: #{seq2seq_forward.3} parent=1 // pred_check_branch
      %28 = sbr.rel (0) target = $region13
    $region12: #{seq2seq_forward.3} parent=1 // pred_region
      _
    $region13: #{seq2seq_forward.3} parent=1 // pred_fallthru
      _
    // Predicated region
    $region14: #{seq2seq_forward.3} parent=1 // pred_check
      _
    $region15: #{seq2seq_forward.3} parent=1 // pred_check_branch
      %30 = sbr.rel (0) target = $region17
    $region16: #{seq2seq_forward.3} parent=1 // pred_region
      _
    $region17: #{seq2seq_forward.3} parent=1 // pred_fallthru
      _
    // Predicated region
    $region18: #{seq2seq_forward.3} parent=1 // pred_check
      _
    $region19: #{seq2seq_forward.3} parent=1 // pred_check_branch
      %32 = sbr.rel (0) target = $region21
    $region20: #{seq2seq_forward.3} parent=1 // pred_region
      _
    $region21: #{seq2seq_forward.3} parent=1 // pred_fallthru
      _
    // Predicated region
    $region22: #{seq2seq_forward.3} parent=1 // pred_check
      _
    $region23: #{seq2seq_forward.3} parent=1 // pred_check_branch
      %34 = sbr.rel (0) target = $region25
    $region24: #{seq2seq_forward.3} parent=1 // pred_region
      _
    $region25: #{seq2seq_forward.3} parent=1 // pred_fallthru
      _
    // Predicated region
    $region26: #{seq2seq_forward.3} parent=1 // pred_check
      _
    $region27: #{seq2seq_forward.3} parent=1 // pred_check_branch
      %36 = sbr.rel (0) target = $region29
    $region28: #{seq2seq_forward.3} parent=1 // pred_region
      _
    $region29: #{seq2seq_forward.3} parent=1 // pred_fallthru
      _
    // Predicated region
    $region30: #{seq2seq_forward.3} parent=1 // pred_check
      _
    $region31: #{seq2seq_forward.3} parent=1 // pred_check_branch
      %38 = sbr.rel (0) target = $region33
    $region32: #{seq2seq_forward.3} parent=1 // pred_region
      _
    $region33: #{seq2seq_forward.3} parent=1 // pred_fallthru
      _
    // Predicated region
    $region34: #{seq2seq_forward.3} parent=1 // pred_check
      _
    $region35: #{seq2seq_forward.3} parent=1 // pred_check_branch
      %40 = sbr.rel (0) target = $region37
    $region36: #{seq2seq_forward.3} parent=1 // pred_region
      _
    $region37: #{seq2seq_forward.3} parent=1 // pred_fallthru
      _
    // Predicated region
    $region38: #{seq2seq_forward.3} parent=1 // pred_check
      _
    $region39: #{seq2seq_forward.3} parent=1 // pred_check_branch
      %42 = sbr.rel (0) target = $region41
    $region40: #{seq2seq_forward.3} parent=1 // pred_region
      %43 = dma.done [#allocation3], 16
    $region41: #{seq2seq_forward.3} parent=1 // pred_fallthru
      _
    %44 = sfence
    %v45 = vld [vmem:[%s4] sm:$0xff]
    %v46 = vld [vmem:[%s4 + $0x8] sm:$0xff]
    %v47 = vld [vmem:[%s4 + $0x10] sm:$0xff]
    %v48 = vld [vmem:[%s4 + $0x18] sm:$0xff]
    %v49 = vld [vmem:[%s4 + $0x20] sm:$0xff]
    %v50 = vld [vmem:[%s4 + $0x28] sm:$0xff]
    %v51 = vld [vmem:[%s4 + $0x30] sm:$0xff]
    %v52 = vld [vmem:[%s4 + $0x38] sm:$0xff]
    %v53 = vld [vmem:[%s4 + $0x40] sm:$0xff]
    %v54 = vld [vmem:[%s4 + $0x48] sm:$0xff]
    %v55 = vld [vmem:[%s4 + $0x50] sm:$0xff]
    %v56 = vld [vmem:[%s4 + $0x58] sm:$0xff]
    %v57 = vld [vmem:[%s4 + $0x60] sm:$0xff]
    %v58 = vld [vmem:[%s4 + $0x68] sm:$0xff]
    %v59 = vld [vmem:[%s4 + $0x70] sm:$0xff]
    %v60 = vld [vmem:[%s4 + $0x78] sm:$0xff]
    %v61 = vld [vmem:[%s5] sm:$0xff]
    %v62 = vld [vmem:[%s5 + $0x8] sm:$0xff]
    %v63 = vld [vmem:[%s5 + $0x10] sm:$0xff]
    %v64 = vld [vmem:[%s5 + $0x18] sm:$0xff]
    %v65 = vld [vmem:[%s5 + $0x20] sm:$0xff]
    %v66 = vld [vmem:[%s5 + $0x28] sm:$0xff]
    %v67 = vld [vmem:[%s5 + $0x30] sm:$0xff]
    %v68 = vld [vmem:[%s5 + $0x38] sm:$0xff]
    %v69 = vld [vmem:[%s5 + $0x40] sm:$0xff]
    %v70 = vld [vmem:[%s5 + $0x48] sm:$0xff]
    %v71 = vld [vmem:[%s5 + $0x50] sm:$0xff]
    %v72 = vld [vmem:[%s5 + $0x58] sm:$0xff]
    %v73 = vld [vmem:[%s5 + $0x60] sm:$0xff]
    %v74 = vld [vmem:[%s5 + $0x68] sm:$0xff]
    %v75 = vld [vmem:[%s5 + $0x70] sm:$0xff]
    %v76 = vld [vmem:[%s5 + $0x78] sm:$0xff]
    %v77 = vld [vmem:[%s5 + $0x80] sm:$0xff]
    %v78 = vld [vmem:[%s5 + $0x88] sm:$0xff]
    %v79 = vld [vmem:[%s5 + $0x90] sm:$0xff]
    %v80 = vld [vmem:[%s5 + $0x98] sm:$0xff]
    %v81 = vld [vmem:[%s5 + $0xa0] sm:$0xff]
    %v82 = vld [vmem:[%s5 + $0xa8] sm:$0xff]
    %v83 = vld [vmem:[%s5 + $0xb0] sm:$0xff]
    %v84 = vld [vmem:[%s5 + $0xb8] sm:$0xff]
    %v85 = vld [vmem:[%s5 + $0xc0] sm:$0xff]
    %v86 = vld [vmem:[%s5 + $0xc8] sm:$0xff]
    %v87 = vld [vmem:[%s5 + $0xd0] sm:$0xff]
    %v88 = vld [vmem:[%s5 + $0xd8] sm:$0xff]
    %v89 = vld [vmem:[%s5 + $0xe0] sm:$0xff]
    %v90 = vld [vmem:[%s5 + $0xe8] sm:$0xff]
    %v91 = vld [vmem:[%s5 + $0xf0] sm:$0xff]
    %v92 = vld [vmem:[%s5 + $0xf8] sm:$0xff]
    %v93 = vld [vmem:[%s5 + $0x100] sm:$0xff]
    %v94 = vld [vmem:[%s5 + $0x108] sm:$0xff]
    %v95 = vld [vmem:[%s5 + $0x110] sm:$0xff]
    %v96 = vld [vmem:[%s5 + $0x118] sm:$0xff]
    %v97 = vld [vmem:[%s5 + $0x120] sm:$0xff]
    %v98 = vld [vmem:[%s5 + $0x128] sm:$0xff]
    %v99 = vld [vmem:[%s5 + $0x130] sm:$0xff]
    %v100 = vld [vmem:[%s5 + $0x138] sm:$0xff]
    %v101 = vld [vmem:[%s5 + $0x140] sm:$0xff]
    %v102 = vld [vmem:[%s5 + $0x148] sm:$0xff]
    %v103 = vld [vmem:[%s5 + $0x150] sm:$0xff]
    %v104 = vld [vmem:[%s5 + $0x158] sm:$0xff]
    %v105 = vld [vmem:[%s5 + $0x160] sm:$0xff]
    %v106 = vld [vmem:[%s5 + $0x168] sm:$0xff]
    %v107 = vld [vmem:[%s5 + $0x170] sm:$0xff]
    %v108 = vld [vmem:[%s5 + $0x178] sm:$0xff]
    %v109 = vld [vmem:[%s5 + $0x180] sm:$0xff]
    %v110 = vld [vmem:[%s5 + $0x188] sm:$0xff]
    %v111 = vld [vmem:[%s5 + $0x190] sm:$0xff]
    %v112 = vld [vmem:[%s5 + $0x198] sm:$0xff]
    %v113 = vld [vmem:[%s5 + $0x1a0] sm:$0xff]
    %v114 = vld [vmem:[%s5 + $0x1a8] sm:$0xff]
    %v115 = vld [vmem:[%s5 + $0x1b0] sm:$0xff]
    %v116 = vld [vmem:[%s5 + $0x1b8] sm:$0xff]
    %v117 = vld [vmem:[%s5 + $0x1c0] sm:$0xff]
    %v118 = vld [vmem:[%s5 + $0x1c8] sm:$0xff]
    %v119 = vld [vmem:[%s5 + $0x1d0] sm:$0xff]
    %v120 = vld [vmem:[%s5 + $0x1d8] sm:$0xff]
    %v121 = vld [vmem:[%s5 + $0x1e0] sm:$0xff]
    %v122 = vld [vmem:[%s5 + $0x1e8] sm:$0xff]
    %v123 = vld [vmem:[%s5 + $0x1f0] sm:$0xff]
    %v124 = vld [vmem:[%s5 + $0x1f8] sm:$0xff]
    %v125 = vld [vmem:[%s5 + $0x200] sm:$0xff]
    %v126 = vld [vmem:[%s5 + $0x208] sm:$0xff]
    %v127 = vld [vmem:[%s5 + $0x210] sm:$0xff]
    %v128 = vld [vmem:[%s5 + $0x218] sm:$0xff]
    %v129 = vld [vmem:[%s5 + $0x220] sm:$0xff]
    %v130 = vld [vmem:[%s5 + $0x228] sm:$0xff]
    %v131 = vld [vmem:[%s5 + $0x230] sm:$0xff]
    %v132 = vld [vmem:[%s5 + $0x238] sm:$0xff]
    %v133 = vld [vmem:[%s5 + $0x240] sm:$0xff]
    %v134 = vld [vmem:[%s5 + $0x248] sm:$0xff]
    %v135 = vld [vmem:[%s5 + $0x250] sm:$0xff]
    %v136 = vld [vmem:[%s5 + $0x258] sm:$0xff]
    %v137 = vld [vmem:[%s5 + $0x260] sm:$0xff]
    %v138 = vld [vmem:[%s5 + $0x268] sm:$0xff]
    %v139 = vld [vmem:[%s5 + $0x270] sm:$0xff]
    %v140 = vld [vmem:[%s5 + $0x278] sm:$0xff]
    %v141 = vld [vmem:[%s6] sm:$0xf]
    %v142 = vld [vmem:[%s7] sm:$0xff]
    %v143 = vld [vmem:[%s7 + $0x8] sm:$0xff]
    %v144 = vld [vmem:[%s7 + $0x10] sm:$0xff]
    %v145 = vld [vmem:[%s7 + $0x18] sm:$0xff]
    %v146 = vld [vmem:[%s7 + $0x20] sm:$0xff]
    %v147 = vld [vmem:[%s7 + $0x28] sm:$0xff]
    %v148 = vld [vmem:[%s7 + $0x30] sm:$0xff]
    %v149 = vld [vmem:[%s7 + $0x38] sm:$0xff]
    %v150 = vld [vmem:[%s7 + $0x40] sm:$0xff]
    %v151 = vld [vmem:[%s7 + $0x48] sm:$0xff]
    %v152 = vld [vmem:[%s7 + $0x50] sm:$0xff]
    %v153 = vld [vmem:[%s7 + $0x58] sm:$0xff]
    %v154 = vld [vmem:[%s7 + $0x60] sm:$0xff]
    %v155 = vld [vmem:[%s7 + $0x68] sm:$0xff]
    %v156 = vld [vmem:[%s7 + $0x70] sm:$0xff]
    %v157 = vld [vmem:[%s7 + $0x78] sm:$0xff]
    %v158 = vld [vmem:[%s8] sm:$0x1]
    %v159 = vld [vmem:[%s0] sm:$0xff]
    %v160 = vlaneseq
    %v161 = vand.u32 %v160, 127
    %162 = vst [vmem:[%s9] sm:$0xff] 0.0
    %163 = vst [vmem:[%s9 + $0x8] sm:$0xff] 0.0
    %164 = vst [vmem:[%s9 + $0x10] sm:$0xff] 0.0
    %165 = vst [vmem:[%s9 + $0x18] sm:$0xff] 0.0
    %166 = vst [vmem:[%s9 + $0x20] sm:$0xff] 0.0
    %167 = vst [vmem:[%s9 + $0x28] sm:$0xff] 0.0
    %168 = vst [vmem:[%s9 + $0x30] sm:$0xff] 0.0
    %169 = vst [vmem:[%s9 + $0x38] sm:$0xff] 0.0
    %vm170 = vcmp.eq.s32.totalorder %v161, 0
    %v171 = vsel %vm170, %v159, 0
    %vm172 = vcmask 64512
    %v173 = vsel %vm172, %v171, 0
    %v174 = vand.u32 %v173, 65535
    %v175 = vshrl.u32 %v173, 16
    %v176 = vcvt.s32.f32 %v174
    %v177 = vcvt.s32.f32 %v175
    %178 = vadd.xlane.f32.xlu0 %v176
    %v179 = vpop.xlane.xlu0 %178
    %180 = vadd.xlane.f32.xlu0 %v177
    %v181 = vpop.xlane.xlu0 %180
    %v182 = vcvt.f32.s32 %v179
    %v183 = vcvt.f32.s32 %v181
    %v184 = vshll.u32 %v183, 16
    %v185 = vadd.s32 %v184, %v182
    %v186 = vld [vmem:[%s2] sm:$0xff]
    %v187 = vld [vmem:[%s3] sm:$0xff]
    loop: start=1, step=1, limit=8
    $region42: #{seq2seq_forward.3} parent=1 // loop_pre_header
      _
    $region43: #{seq2seq_forward.3} parent=1 // loop_header
      %s189 = sphi 1, %s193
      %p190 = scmp.ge.s32.totalorder %s189, 8
      %v194 = vphi %v185, %v585
      %v195 = vphi %v186, %v464
      %v196 = vphi %v187, %v462
    $region44: #{seq2seq_forward.3} parent=1 // loop_header_branch
      %192 = sbr.rel (%p190) target = $region48
    $region45: #{seq2seq_forward.3} parent=1 // loop_body
      %vm197 = vcmp.eq.s32.totalorder %v161, %v194
      %v198 = vsel %vm197, 1, 0
      %v199 = vcvt.s32.f32 %v198
      %200 = vmatprep.subr.mxu0 0.0
      %201 = vmatpush1.msra.mxu0 %v45
      %202 = vmatprep.subr.mxu0 0.0
      %203 = vmatpush1.msra.mxu0 %v46
      %204 = vmatprep.subr.mxu0 0.0
      %205 = vmatpush1.msra.mxu0 %v47
      %206 = vmatprep.subr.mxu0 0.0
      %207 = vmatpush1.msra.mxu0 %v48
      %208 = vmatprep.subr.mxu0 0.0
      %209 = vmatpush1.msra.mxu0 %v49
      %210 = vmatprep.subr.mxu0 0.0
      %211 = vmatpush1.msra.mxu0 %v50
      %212 = vmatprep.subr.mxu0 0.0
      %213 = vmatpush1.msra.mxu0 %v51
      %214 = vmatprep.subr.mxu0 0.0
      %215 = vmatpush1.msra.mxu0 %v52
      %216 = vmatprep.subr.mxu0 0.0
      %217 = vmatpush1.msra.mxu0 %v53
      %218 = vmatprep.subr.mxu0 0.0
      %219 = vmatpush1.msra.mxu0 %v54
      %220 = vmatprep.subr.mxu0 0.0
      %221 = vmatpush1.msra.mxu0 %v55
      %222 = vmatprep.subr.mxu0 0.0
      %223 = vmatpush1.msra.mxu0 %v56
      %224 = vmatprep.subr.mxu0 0.0
      %225 = vmatpush1.msra.mxu0 %v57
      %226 = vmatprep.subr.mxu0 0.0
      %227 = vmatpush1.msra.mxu0 %v58
      %228 = vmatprep.subr.mxu0 0.0
      %229 = vmatpush1.msra.mxu0 %v59
      %230 = vmatprep.subr.mxu0 0.0
      %231 = vmatpush1.msra.mxu0 %v60
      %232 = vmatprep.subr.mxu0 0.0
      %233 = vmatpush1.msra.mxu0 0.0
      %234 = vmatprep.subr.mxu0 0.0
      %235 = vmatpush1.msra.mxu0 0.0
      %236 = vmatprep.subr.mxu0 0.0
      %237 = vmatpush1.msra.mxu0 0.0
      %238 = vmatprep.subr.mxu0 0.0
      %239 = vmatpush1.msra.mxu0 0.0
      %240 = vmatprep.subr.mxu0 0.0
      %241 = vmatpush1.msra.mxu0 0.0
      %242 = vmatprep.subr.mxu0 0.0
      %243 = vmatpush1.msra.mxu0 0.0
      %244 = vmatprep.subr.mxu0 0.0
      %245 = vmatpush1.msra.mxu0 0.0
      %246 = vmatprep.subr.mxu0 0.0
      %247 = vmatpush1.msra.mxu0 0.0
      %248 = vmatprep.subr.mxu0 0.0
      %249 = vmatpush1.msra.mxu0 0.0
      %250 = vmatprep.subr.mxu0 0.0
      %251 = vmatpush1.msra.mxu0 0.0
      %252 = vmatprep.subr.mxu0 0.0
      %253 = vmatpush1.msra.mxu0 0.0
      %254 = vmatprep.subr.mxu0 0.0
      %255 = vmatpush1.msra.mxu0 0.0
      %256 = vmatprep.subr.mxu0 0.0
      %257 = vmatpush1.msra.mxu0 0.0
      %258 = vmatprep.subr.mxu0 0.0
      %259 = vmatpush1.msra.mxu0 0.0
      %260 = vmatprep.subr.mxu0 0.0
      %261 = vmatpush1.msra.mxu0 0.0
      %262 = vmatprep.subr.mxu0 0.0
      %263 = vmatpush1.msra.mxu0 0.0
      %264 = vmatprep.mubr.f32.mxu0 0.0
      %265 = vmatmul.mubr.f32.gmra.mrb[0].mxu0 %v199
      %v266 = vpop.f32.mrb[0].mxu0
      %v267 = vadd.f32 0.0, %v266
      %v268 = vpop.f32.mrb[0].mxu0
      %269 = vdwg.mxu0
      %271 = vrot.lane.b32.xlu0 %v195, 32
      %v272 = vpop.permute.xlu0 %271
      %vm274 = vcmask 261120
      %v275 = vsel %vm274, %v267, %v272
      %v277 = vlaneseq
      %v278 = vshrl.u32 %v277, 7
      %v279 = vsub.s32 0, %v278
      %v280 = vrot.slane %v141, %v279
      %v281 = vlaneseq
      %v282 = vshrl.u32 %v281, 7
      %v283 = vsub.s32 1, %v282
      %v284 = vrot.slane %v141, %v283
      %v285 = vlaneseq
      %v286 = vshrl.u32 %v285, 7
      %v287 = vsub.s32 2, %v286
      %v288 = vrot.slane %v141, %v287
      %v289 = vlaneseq
      %v290 = vshrl.u32 %v289, 7
      %v291 = vsub.s32 3, %v290
      %v292 = vrot.slane %v141, %v291
      %v297 = vsel %vm274, %v272, 0
      %299 = vmatprep.subr.mxu0 %v62
      %300 = vmatpush1.msra.mxu0 %v61
      %301 = vmatprep.subr.mxu0 %v66
      %302 = vmatpush1.msra.mxu0 %v65
      %303 = vmatprep.subr.mxu0 %v70
      %304 = vmatpush1.msra.mxu0 %v69
      %305 = vmatprep.subr.mxu0 %v74
      %306 = vmatpush1.msra.mxu0 %v73
      %307 = vmatprep.subr.mxu0 %v78
      %308 = vmatpush1.msra.mxu0 %v77
      %309 = vmatprep.subr.mxu0 %v82
      %310 = vmatpush1.msra.mxu0 %v81
      %311 = vmatprep.subr.mxu0 %v86
      %312 = vmatpush1.msra.mxu0 %v85
      %313 = vmatprep.subr.mxu0 %v90
      %314 = vmatpush1.msra.mxu0 %v89
      %315 = vmatprep.subr.mxu0 %v94
      %316 = vmatpush1.msra.mxu0 %v93
      %317 = vmatprep.subr.mxu0 %v98
      %318 = vmatpush1.msra.mxu0 %v97
      %319 = vmatprep.subr.mxu0 %v102
      %320 = vmatpush1.msra.mxu0 %v101
      %321 = vmatprep.subr.mxu0 %v106
      %322 = vmatpush1.msra.mxu0 %v105
      %323 = vmatprep.subr.mxu0 %v110
      %324 = vmatpush1.msra.mxu0 %v109
      %325 = vmatprep.subr.mxu0 %v114
      %326 = vmatpush1.msra.mxu0 %v113
      %327 = vmatprep.subr.mxu0 %v118
      %328 = vmatpush1.msra.mxu0 %v117
      %329 = vmatprep.subr.mxu0 %v122
      %330 = vmatpush1.msra.mxu0 %v121
      %331 = vmatprep.subr.mxu0 %v126
      %332 = vmatpush1.msra.mxu0 %v125
      %333 = vmatprep.subr.mxu0 %v130
      %334 = vmatpush1.msra.mxu0 %v129
      %335 = vmatprep.subr.mxu0 %v134
      %336 = vmatpush1.msra.mxu0 %v133
      %337 = vmatprep.subr.mxu0 %v138
      %338 = vmatpush1.msra.mxu0 %v137
      %339 = vmatprep.subr.mxu0 0.0
      %340 = vmatpush1.msra.mxu0 0.0
      %341 = vmatprep.subr.mxu0 0.0
      %342 = vmatpush1.msra.mxu0 0.0
      %343 = vmatprep.subr.mxu0 0.0
      %344 = vmatpush1.msra.mxu0 0.0
      %345 = vmatprep.subr.mxu0 0.0
      %346 = vmatpush1.msra.mxu0 0.0
      %347 = vmatprep.subr.mxu0 0.0
      %348 = vmatpush1.msra.mxu0 0.0
      %349 = vmatprep.subr.mxu0 0.0
      %350 = vmatpush1.msra.mxu0 0.0
      %351 = vmatprep.subr.mxu0 0.0
      %352 = vmatpush1.msra.mxu0 0.0
      %353 = vmatprep.subr.mxu0 0.0
      %354 = vmatpush1.msra.mxu0 0.0
      %355 = vmatprep.subr.mxu0 0.0
      %356 = vmatpush1.msra.mxu0 0.0
      %357 = vmatprep.subr.mxu0 0.0
      %358 = vmatpush1.msra.mxu0 0.0
      %359 = vmatprep.subr.mxu0 0.0
      %360 = vmatpush1.msra.mxu0 0.0
      %361 = vmatprep.subr.mxu0 0.0
      %362 = vmatpush1.msra.mxu0 0.0
      %363 = vmatprep.mubr.f32.mxu0 %v297
      %364 = vmatmul.mubr.f32.gmra.mrb[0].mxu0 %v275
      %v365 = vpop.f32.mrb[0].mxu0
      %v366 = vadd.f32 %v280, %v365
      %v367 = vpop.f32.mrb[0].mxu0
      %v368 = vadd.f32 %v284, %v367
      %369 = vdwg.mxu0
      %370 = vmatprep.subr.mxu0 %v64
      %371 = vmatpush1.msra.mxu0 %v63
      %372 = vmatprep.subr.mxu0 %v68
      %373 = vmatpush1.msra.mxu0 %v67
      %374 = vmatprep.subr.mxu0 %v72
      %375 = vmatpush1.msra.mxu0 %v71
      %376 = vmatprep.subr.mxu0 %v76
      %377 = vmatpush1.msra.mxu0 %v75
      %378 = vmatprep.subr.mxu0 %v80
      %379 = vmatpush1.msra.mxu0 %v79
      %380 = vmatprep.subr.mxu0 %v84
      %381 = vmatpush1.msra.mxu0 %v83
      %382 = vmatprep.subr.mxu0 %v88
      %383 = vmatpush1.msra.mxu0 %v87
      %384 = vmatprep.subr.mxu0 %v92
      %385 = vmatpush1.msra.mxu0 %v91
      %386 = vmatprep.subr.mxu0 %v96
      %387 = vmatpush1.msra.mxu0 %v95
      %388 = vmatprep.subr.mxu0 %v100
      %389 = vmatpush1.msra.mxu0 %v99
      %390 = vmatprep.subr.mxu0 %v104
      %391 = vmatpush1.msra.mxu0 %v103
      %392 = vmatprep.subr.mxu0 %v108
      %393 = vmatpush1.msra.mxu0 %v107
      %394 = vmatprep.subr.mxu0 %v112
      %395 = vmatpush1.msra.mxu0 %v111
      %396 = vmatprep.subr.mxu0 %v116
      %397 = vmatpush1.msra.mxu0 %v115
      %398 = vmatprep.subr.mxu0 %v120
      %399 = vmatpush1.msra.mxu0 %v119
      %400 = vmatprep.subr.mxu0 %v124
      %401 = vmatpush1.msra.mxu0 %v123
      %402 = vmatprep.subr.mxu0 %v128
      %403 = vmatpush1.msra.mxu0 %v127
      %404 = vmatprep.subr.mxu0 %v132
      %405 = vmatpush1.msra.mxu0 %v131
      %406 = vmatprep.subr.mxu0 %v136
      %407 = vmatpush1.msra.mxu0 %v135
      %408 = vmatprep.subr.mxu0 %v140
      %409 = vmatpush1.msra.mxu0 %v139
      %410 = vmatprep.subr.mxu0 0.0
      %411 = vmatpush1.msra.mxu0 0.0
      %412 = vmatprep.subr.mxu0 0.0
      %413 = vmatpush1.msra.mxu0 0.0
      %414 = vmatprep.subr.mxu0 0.0
      %415 = vmatpush1.msra.mxu0 0.0
      %416 = vmatprep.subr.mxu0 0.0
      %417 = vmatpush1.msra.mxu0 0.0
      %418 = vmatprep.subr.mxu0 0.0
      %419 = vmatpush1.msra.mxu0 0.0
      %420 = vmatprep.subr.mxu0 0.0
      %421 = vmatpush1.msra.mxu0 0.0
      %422 = vmatprep.subr.mxu0 0.0
      %423 = vmatpush1.msra.mxu0 0.0
      %424 = vmatprep.subr.mxu0 0.0
      %425 = vmatpush1.msra.mxu0 0.0
      %426 = vmatprep.subr.mxu0 0.0
      %427 = vmatpush1.msra.mxu0 0.0
      %428 = vmatprep.subr.mxu0 0.0
      %429 = vmatpush1.msra.mxu0 0.0
      %430 = vmatprep.subr.mxu0 0.0
      %431 = vmatpush1.msra.mxu0 0.0
      %432 = vmatprep.subr.mxu0 0.0
      %433 = vmatpush1.msra.mxu0 0.0
      %434 = vmatprep.mubr.f32.mxu0 %v297
      %435 = vmatmul.mubr.f32.gmra.mrb[0].mxu0 %v275
      %v436 = vpop.f32.mrb[0].mxu0
      %v437 = vadd.f32 %v288, %v436
      %v438 = vpop.f32.mrb[0].mxu0
      %v439 = vadd.f32 %v292, %v438
      %440 = vdwg.mxu0
      %v441 = vxor.u32 %v366, 2147483648
      %v442 = vmul.f32 %v441, 1.442695
      %v443 = vpow.pop %v442
      %v444 = vadd.f32 %v443, 1.0
      %v445 = vrcp.pop %v444
      %v446 = vmul.f32 1.0, %v445
      %v447 = vxor.u32 %v368, 2147483648
      %v448 = vmul.f32 %v447, 1.442695
      %v449 = vpow.pop %v448
      %v450 = vadd.f32 %v449, 1.0
      %v451 = vrcp.pop %v450
      %v452 = vmul.f32 1.0, %v451
      %v453 = vtanh.pop %v437
      %v454 = vxor.u32 %v439, 2147483648
      %v455 = vmul.f32 %v454, 1.442695
      %v456 = vpow.pop %v455
      %v457 = vadd.f32 %v456, 1.0
      %v458 = vrcp.pop %v457
      %v459 = vmul.f32 1.0, %v458
      %v460 = vmul.f32 %v452, %v196
      %v461 = vmul.f32 %v446, %v453
      %v462 = vadd.f32 %v460, %v461
      %v463 = vtanh.pop %v462
      %v464 = vmul.f32 %v459, %v463
      %v466 = vlaneseq
      %v467 = vshrl.u32 %v466, 7
      %v468 = vsub.s32 0, %v467
      %v469 = vrot.slane %v158, %v468
      %471 = vmatprep.subr.mxu0 0.0
      %472 = vmatpush1.msra.mxu0 %v142
      %473 = vmatprep.subr.mxu0 0.0
      %474 = vmatpush1.msra.mxu0 %v143
      %475 = vmatprep.subr.mxu0 0.0
      %476 = vmatpush1.msra.mxu0 %v144
      %477 = vmatprep.subr.mxu0 0.0
      %478 = vmatpush1.msra.mxu0 %v145
      %479 = vmatprep.subr.mxu0 0.0
      %480 = vmatpush1.msra.mxu0 %v146
      %481 = vmatprep.subr.mxu0 0.0
      %482 = vmatpush1.msra.mxu0 %v147
      %483 = vmatprep.subr.mxu0 0.0
      %484 = vmatpush1.msra.mxu0 %v148
      %485 = vmatprep.subr.mxu0 0.0
      %486 = vmatpush1.msra.mxu0 %v149
      %487 = vmatprep.subr.mxu0 0.0
      %488 = vmatpush1.msra.mxu0 %v150
      %489 = vmatprep.subr.mxu0 0.0
      %490 = vmatpush1.msra.mxu0 %v151
      %491 = vmatprep.subr.mxu0 0.0
      %492 = vmatpush1.msra.mxu0 %v152
      %493 = vmatprep.subr.mxu0 0.0
      %494 = vmatpush1.msra.mxu0 %v153
      %495 = vmatprep.subr.mxu0 0.0
      %496 = vmatpush1.msra.mxu0 %v154
      %497 = vmatprep.subr.mxu0 0.0
      %498 = vmatpush1.msra.mxu0 %v155
      %499 = vmatprep.subr.mxu0 0.0
      %500 = vmatpush1.msra.mxu0 %v156
      %501 = vmatprep.subr.mxu0 0.0
      %502 = vmatpush1.msra.mxu0 %v157
      %503 = vmatprep.subr.mxu0 0.0
      %504 = vmatpush1.msra.mxu0 0.0
      %505 = vmatprep.subr.mxu0 0.0
      %506 = vmatpush1.msra.mxu0 0.0
      %507 = vmatprep.subr.mxu0 0.0
      %508 = vmatpush1.msra.mxu0 0.0
      %509 = vmatprep.subr.mxu0 0.0
      %510 = vmatpush1.msra.mxu0 0.0
      %511 = vmatprep.subr.mxu0 0.0
      %512 = vmatpush1.msra.mxu0 0.0
      %513 = vmatprep.subr.mxu0 0.0
      %514 = vmatpush1.msra.mxu0 0.0
      %515 = vmatprep.subr.mxu0 0.0
      %516 = vmatpush1.msra.mxu0 0.0
      %517 = vmatprep.subr.mxu0 0.0
      %518 = vmatpush1.msra.mxu0 0.0
      %519 = vmatprep.subr.mxu0 0.0
      %520 = vmatpush1.msra.mxu0 0.0
      %521 = vmatprep.subr.mxu0 0.0
      %522 = vmatpush1.msra.mxu0 0.0
      %523 = vmatprep.subr.mxu0 0.0
      %524 = vmatpush1.msra.mxu0 0.0
      %525 = vmatprep.subr.mxu0 0.0
      %526 = vmatpush1.msra.mxu0 0.0
      %527 = vmatprep.subr.mxu0 0.0
      %528 = vmatpush1.msra.mxu0 0.0
      %529 = vmatprep.subr.mxu0 0.0
      %530 = vmatpush1.msra.mxu0 0.0
      %531 = vmatprep.subr.mxu0 0.0
      %532 = vmatpush1.msra.mxu0 0.0
      %533 = vmatprep.subr.mxu0 0.0
      %534 = vmatpush1.msra.mxu0 0.0
      %535 = vmatprep.mubr.f32.mxu0 0.0
      %536 = vmatmul.mubr.f32.gmra.mrb[0].mxu0 %v464
      %v537 = vpop.f32.mrb[0].mxu0
      %v538 = vadd.f32 %v469, %v537
      %v539 = vpop.f32.mrb[0].mxu0
      %540 = vdwg.mxu0
      %s541 = smul.u32 %s189, 8
      %s542 = scalar_lea.vmem %s9, %s541
      %543 = vst [vmem:[%s542] sm:$0xff] %v538
      %vm544 = vcmp.lt.s32.totalorder %v161, 40
      %v545 = vsel %vm544, %v538, -1e+30
      %546 = vmax.xlane.f32.xlu0 %v545
      %v547 = vpop.xlane.xlu0 %546
      %vm548 = vcmp.eq.f32.partialorder %v545, %v547
      %v549 = vsel %vm548, %v161, 128
      %v550 = vand.u32 %v549, 65535
      %v551 = vshra.s32 %v549, 16
      %v552 = vcvt.s32.f32 %v550
      %v553 = vcvt.s32.f32 %v551
      %554 = vmin.xlane.f32.xlu0 %v553
      %v555 = vpop.xlane.xlu0 %554
      %vm556 = vcmp.eq.f32.partialorder %v553, %v555
      %v557 = vsel %vm556, %v552, inf
      %558 = vmin.xlane.f32.xlu0 %v557
      %v559 = vpop.xlane.xlu0 %558
      %v560 = vcvt.f32.s32 %v559
      %v561 = vcvt.f32.s32 %v555
      %v562 = vshll.u32 %v561, 16
      %v563 = vadd.s32 %v562, %v560
      %s564 = sld [smem:[#allocation2 + %s189]]
      %p565 = scmp.gt.s32.totalorder %s564, 0
      %v566 = vstv %s189
      %vm567 = vcmp.eq.s32.totalorder %v161, %v566
      %v568 = vsel %vm567, %v159, 0
      %v569 = vsel %vm172, %v568, 0
      %v570 = vand.u32 %v569, 65535
      %v571 = vshrl.u32 %v569, 16
      %v572 = vcvt.s32.f32 %v570
      %v573 = vcvt.s32.f32 %v571
      %574 = vadd.xlane.f32.xlu0 %v572
      %v575 = vpop.xlane.xlu0 %574
      %576 = vadd.xlane.f32.xlu0 %v573
      %v577 = vpop.xlane.xlu0 %576
      %v578 = vcvt.f32.s32 %v575
      %v579 = vcvt.f32.s32 %v577
      %v580 = vshll.u32 %v579, 16
      %v581 = vadd.s32 %v580, %v578
      %s582 = scalar_select %p565, 1, 0
      %v583 = vstv %s582
      %vm584 = vcmp.eq.s32.totalorder %v583, 1
      %v585 = vsel %vm584, %v581, %v563
    $region46: #{seq2seq_forward.3} parent=1 // loop_footer
      %s193 = sadd.s32 1, %s189
    $region47: #{seq2seq_forward.3} parent=1 // loop_footer_branch
      %188 = sbr.rel target = $region43
    $region48: #{seq2seq_forward.3} parent=1 // loop_exit
      _
    // Predicated region
    $region49: #{seq2seq_forward.3} parent=1 // pred_check
      _
    $region50: #{seq2seq_forward.3} parent=1 // pred_check_branch
      %587 = sbr.rel (0) target = $region52
    $region51: #{seq2seq_forward.3} parent=1 // pred_region
      _
    $region52: #{seq2seq_forward.3} parent=1 // pred_fallthru
      _
    // Predicated region
    $region53: #{seq2seq_forward.3} parent=1 // pred_check
      _
    $region54: #{seq2seq_forward.3} parent=1 // pred_check_branch
      %589 = sbr.rel (0) target = $region56
    $region55: #{seq2seq_forward.3} parent=1 // pred_region
      _
    $region56: #{seq2seq_forward.3} parent=1 // pred_fallthru
      _
    %590 = vsyncpa [#allocation3], 1

</llo_original>
